<compile_context>
chip_gen: v6e
topology: v6e:2x2x1
jax: 0.10.0
libtpu: 0.0.40
codegen_flags: <defaults>
</compile_context>

<pallas_src>
import functools

import jax
import jax.numpy as jnp
from jax import lax
from jax.experimental import pallas as pl
from jax.experimental.pallas import tpu as pltpu

GROWTH, BN_SIZE, INIT_FEAT = 32, 4, 64
BLOCK_CFG = (6, 12, 32, 32)          # densenet169
NUM_CLASSES = 1000
BN_EPS = 1e-5


def _round_up(x, m):
    return (x + m - 1) // m * m


# --------------------------- fused matmul kernel -----------------------------

def _fused_mm_kernel(a_ref, b_ref, isc_ref, ibi_ref, osc_ref, obi_ref,
                     o_ref, acc_ref, *, nk, prologue, epilogue):
    k = pl.program_id(2)

    @pl.when(k == 0)
    def _():
        acc_ref[...] = jnp.zeros_like(acc_ref)

    a = a_ref[...]
    if prologue:  # fused BN(eval)+ReLU on the (channel-aligned) matmul input
        a = jnp.maximum(a.astype(jnp.float32) * isc_ref[...] + ibi_ref[...], 0.0)
    acc_ref[...] += jnp.dot(a.astype(jnp.bfloat16), b_ref[...],
                            preferred_element_type=jnp.float32)

    @pl.when(k == nk - 1)
    def _():
        y = acc_ref[...]
        if epilogue == "bn_relu":       # fused BN(eval)+ReLU on the matmul output
            y = jnp.maximum(y * osc_ref[...] + obi_ref[...], 0.0)
        elif epilogue == "bias":        # plain linear bias
            y = y + obi_ref[...]
        o_ref[...] = y.astype(o_ref.dtype)


def fused_matmul(a2d, entry, out_dtype=jnp.bfloat16):
    """a2d: (M, K) activation; entry: prepared weight dict (see _prep_conv)."""
    wp = entry["w"]
    K, N = entry["K"], entry["N"]
    Kp, Np = wp.shape
    M = a2d.shape[0]

    tm = 256 if M >= 256 else _round_up(max(M, 8), 8)
    Mp = _round_up(M, tm)
    tn = 256 if Np % 256 == 0 else 128
    tk = max(d for d in (512, 384, 256, 128) if Kp % d == 0)
    nk = Kp // tk

    a_p = jnp.pad(a2d, ((0, Mp - M), (0, Kp - K)))
    zk = jnp.zeros((1, Kp), jnp.float32)
    zn = jnp.zeros((1, Np), jnp.float32)
    isc = entry["in_s"] if entry["in_s"] is not None else zk
    ibi = entry["in_b"] if entry["in_b"] is not None else zk
    osc = entry["out_s"] if entry["out_s"] is not None else zn
    obi = entry["out_b"] if entry["out_b"] is not None else zn

    kernel = functools.partial(
        _fused_mm_kernel, nk=nk,
        prologue=entry["in_s"] is not None, epilogue=entry["epilogue"])

    out = pl.pallas_call(
        kernel,
        out_shape=jax.ShapeDtypeStruct((Mp, Np), out_dtype),
        grid_spec=pltpu.PrefetchScalarGridSpec(
            num_scalar_prefetch=0,
            grid=(Mp // tm, Np // tn, nk),
            in_specs=[
                pl.BlockSpec((tm, tk), lambda i, j, k: (i, k)),
                pl.BlockSpec((tk, tn), lambda i, j, k: (k, j)),
                pl.BlockSpec((1, tk), lambda i, j, k: (0, k)),
                pl.BlockSpec((1, tk), lambda i, j, k: (0, k)),
                pl.BlockSpec((1, tn), lambda i, j, k: (0, j)),
                pl.BlockSpec((1, tn), lambda i, j, k: (0, j)),
            ],
            out_specs=pl.BlockSpec((tm, tn), lambda i, j, k: (i, j)),
            scratch_shapes=[pltpu.VMEM((tm, tn), jnp.float32)]),
        compiler_params=pltpu.CompilerParams(
            dimension_semantics=("parallel", "parallel", "arbitrary")),
    )(a_p, wp, isc, ibi, osc, obi)
    return out[:M, :N]


# ------------------------ standalone BN+ReLU (norm5) --------------------------

def _bn_relu_kernel(x_ref, s_ref, b_ref, o_ref):
    o_ref[...] = jnp.maximum(
        x_ref[...].astype(jnp.float32) * s_ref[...] + b_ref[...], 0.0
    ).astype(o_ref.dtype)


def bn_relu_rows(x2d, scale, bias):
    M, C = x2d.shape
    Cp = _round_up(C, 128)
    tm = 512 if M >= 512 else _round_up(max(M, 8), 8)
    Mp = _round_up(M, tm)
    x_p = jnp.pad(x2d, ((0, Mp - M), (0, Cp - C)))
    s_p = jnp.zeros((1, Cp), jnp.float32).at[0, :C].set(scale.astype(jnp.float32))
    b_p = jnp.zeros((1, Cp), jnp.float32).at[0, :C].set(bias.astype(jnp.float32))
    out = pl.pallas_call(
        _bn_relu_kernel,
        out_shape=jax.ShapeDtypeStruct((Mp, Cp), x2d.dtype),
        grid=(Mp // tm,),
        in_specs=[pl.BlockSpec((tm, Cp), lambda i: (i, 0)),
                  pl.BlockSpec((1, Cp), lambda i: (0, 0)),
                  pl.BlockSpec((1, Cp), lambda i: (0, 0))],
        out_specs=pl.BlockSpec((tm, Cp), lambda i: (i, 0)),
        compiler_params=pltpu.CompilerParams(dimension_semantics=("parallel",)),
    )(x_p, s_p, b_p)
    return out[:M, :C]


# ---------------------------- fused head kernel -------------------------------

def _head_kernel(feat_ref, w1t_ref, wmax_ref, wmean_ref, b1_ref,
                 bns_ref, bnb_ref, w2t_ref, b2_ref, o_ref):
    x = feat_ref[...]                                 # (Bp, 1024); logits in [:, :1000]
    col = lax.broadcasted_iota(jnp.int32, x.shape, 1)
    valid = col < NUM_CLASSES
    mx = jnp.max(jnp.where(valid, x, -jnp.inf), axis=1, keepdims=True)  # torch.max(x,1)
    av = jnp.sum(jnp.where(valid, x, 0.0), axis=1,
                 keepdims=True) / float(NUM_CLASSES)                     # torch.mean(x,1)
    # Linear_layer on cat((x, max_pool, avg_pool), 1), decomposed (no concat)
    h = jnp.dot(x, w1t_ref[...], preferred_element_type=jnp.float32)
    h = h + mx * wmax_ref[...] + av * wmean_ref[...] + b1_ref[...]
    h = jnp.where(h > 0.0, h, jnp.exp(h) - 1.0)                          # ELU
    h = h * bns_ref[...] + bnb_ref[...]                                  # BatchNorm1d (eval)
    # Dropout(0.2) == identity at inference.
    o_ref[...] = jnp.dot(h, w2t_ref[...],
                         preferred_element_type=jnp.float32) + b2_ref[...]


def head_forward(hp, logits):
    B = logits.shape[0]
    Bp = _round_up(max(B, 8), 8)
    Cp = _round_up(NUM_CLASSES, 128)                  # 1024
    feat = jnp.zeros((Bp, Cp), jnp.float32).at[:B, :NUM_CLASSES].set(logits)
    W1 = hp["W1"]                                     # (16, 1002)
    w1t = jnp.zeros((Cp, 128), jnp.float32).at[:NUM_CLASSES, :16].set(W1[:, :NUM_CLASSES].T)
    wmax = jnp.zeros((1, 128), jnp.float32).at[0, :16].set(W1[:, NUM_CLASSES])
    wmean = jnp.zeros((1, 128), jnp.float32).at[0, :16].set(W1[:, NUM_CLASSES + 1])
    b1 = jnp.zeros((1, 128), jnp.float32).at[0, :16].set(hp["b1"])
    bn = hp["bn"]
    scale = bn["gamma"] / jnp.sqrt(bn["var"] + BN_EPS)
    bias = bn["beta"] - bn["mean"] * scale
    bns = jnp.zeros((1, 128), jnp.float32).at[0, :16].set(scale)
    bnb = jnp.zeros((1, 128), jnp.float32).at[0, :16].set(bias)
    w2t = jnp.zeros((128, 128), jnp.float32).at[:16, :1].set(hp["W2"].T)
    b2 = jnp.zeros((1, 128), jnp.float32).at[0, :1].set(hp["b2"])
    out = pl.pallas_call(
        _head_kernel,
        out_shape=jax.ShapeDtypeStruct((Bp, 128), jnp.float32),
        in_specs=[pl.BlockSpec(memory_space=pltpu.MemorySpace.VMEM)] * 9,
        out_specs=pl.BlockSpec(memory_space=pltpu.MemorySpace.VMEM),
    )(feat, w1t, wmax, wmean, b1, bns, bnb, w2t, b2)
    return out[:B, :1]


# --------------------------- conv / pooling glue ------------------------------

def _im2col_nhwc(x, kh, kw, stride, padding):
    n, h, w, c = x.shape
    xp = jnp.pad(x, ((0, 0), (padding, padding), (padding, padding), (0, 0)))
    ho = (h + 2 * padding - kh) // stride + 1
    wo = (w + 2 * padding - kw) // stride + 1
    cols = []
    for i in range(kh):
        for j in range(kw):
            cols.append(xp[:, i:i + stride * ho:stride, j:j + stride * wo:stride, :])
    cols = jnp.concatenate(cols, axis=-1)             # (n, ho, wo, kh*kw*c)
    return cols.reshape(n * ho * wo, kh * kw * c), ho, wo


def conv1x1(x, entry):
    """NHWC 1x1 conv = pure reshape + fused matmul (BN+ReLU fused in/out)."""
    n, h, w, _ = x.shape
    y = fused_matmul(x.reshape(n * h * w, entry["K"]), entry)
    return y.reshape(n, h, w, entry["N"])


def conv_knk(x, entry, kh, kw, stride=1, padding=0):
    cols, ho, wo = _im2col_nhwc(x, kh, kw, stride, padding)
    y = fused_matmul(cols, entry)
    return y.reshape(x.shape[0], ho, wo, entry["N"])


def maxpool_3x3_s2_p1(x):
    return lax.reduce_window(x, jnp.array(-jnp.inf, x.dtype), lax.max,
                             (1, 3, 3, 1), (1, 2, 2, 1),
                             ((0, 0), (1, 1), (1, 1), (0, 0)))


def avgpool_2x2(x):
    n, h, w, c = x.shape
    y = x.reshape(n, h // 2, 2, w // 2, 2, c).astype(jnp.float32).mean(axis=(2, 4))
    return y.astype(x.dtype)


# ------------------------------ parameters ------------------------------------

class _KeyGen:
    def __init__(self, key):
        self._key, self._i = key, 0

    def __call__(self):
        self._i += 1
        return jax.random.fold_in(self._key, self._i)


def _bn_init(kg, c):
    return dict(
        gamma=1.0 + 0.1 * jax.random.normal(kg(), (c,), jnp.float32),
        beta=0.02 * jax.random.normal(kg(), (c,), jnp.float32),
        mean=0.02 * jax.random.normal(kg(), (c,), jnp.float32),
        var=1.0 + 0.1 * jnp.abs(jax.random.normal(kg(), (c,), jnp.float32)),
    )


def _conv_init(kg, out_c, in_c, kh, kw):
    std = (2.0 / (in_c * kh * kw)) ** 0.5
    return std * jax.random.normal(kg(), (out_c, in_c, kh, kw), jnp.float32)


def _linear_init(kg, out_f, in_f):
    bound = 1.0 / (in_f ** 0.5)
    w = jax.random.uniform(kg(), (out_f, in_f), jnp.float32, -bound, bound)
    b = jax.random.uniform(kg(), (out_f,), jnp.float32, -bound, bound)
    return w, b


def init_params(seed=0):
    kg = _KeyGen(jax.random.PRNGKey(seed))
    bb = {"conv0": _conv_init(kg, INIT_FEAT, 3, 7, 7),
          "norm0": _bn_init(kg, INIT_FEAT)}
    blocks, transitions = [], []
    ch = INIT_FEAT
    for bi, n_layers in enumerate(BLOCK_CFG):
        layers = []
        for _ in range(n_layers):
            layers.append(dict(
                norm1=_bn_init(kg, ch),
                conv1=_conv_init(kg, BN_SIZE * GROWTH, ch, 1, 1),
                norm2=_bn_init(kg, BN_SIZE * GROWTH),
                conv2=_conv_init(kg, GROWTH, BN_SIZE * GROWTH, 3, 3),
            ))
            ch += GROWTH
        blocks.append(layers)
        if bi != len(BLOCK_CFG) - 1:
            transitions.append(dict(norm=_bn_init(kg, ch),
                                    conv=_conv_init(kg, ch // 2, ch, 1, 1)))
            ch //= 2
    bb["blocks"], bb["transitions"] = blocks, transitions
    bb["norm5"] = _bn_init(kg, ch)                         # ch == 1664
    bb["classifier_w"], bb["classifier_b"] = _linear_init(kg, NUM_CLASSES, ch)
    w1, b1 = _linear_init(kg, 16, NUM_CLASSES + 2)
    w2, b2 = _linear_init(kg, 1, 16)
    head = dict(W1=w1, b1=b1, bn=_bn_init(kg, 16), W2=w2, b2=b2)
    return dict(backbone=bb, head=head)


# ---------------------- weight preparation (hoisted) ---------------------------

def _fold_bn(bn):
    scale = bn["gamma"] / jnp.sqrt(bn["var"] + BN_EPS)
    bias = bn["beta"] - bn["mean"] * scale
    return scale, bias


def _pad_row(v, length):
    return jnp.zeros((1, length), jnp.float32).at[0, :v.shape[0]].set(
        v.astype(jnp.float32))


def _prep_conv(w, in_bn=None, out_bn=None, out_bias=None):
    """Reshape (O,C,kh,kw) -> padded bf16 (Kp,Np) matmul weight + fused BN params."""
    o, c, kh, kw = w.shape
    K, N = c * kh * kw, o
    Kp, Np = _round_up(K, 128), _round_up(N, 128)
    wm = w.transpose(2, 3, 1, 0).reshape(K, N).astype(jnp.bfloat16)
    wp = jnp.zeros((Kp, Np), jnp.bfloat16).at[:K, :N].set(wm)
    entry = dict(w=wp, K=K, N=N, in_s=None, in_b=None,
                 out_s=None, out_b=None, epilogue=None)
    if in_bn is not None:                      # pre-activation BN+ReLU (1x1 convs only)
        s, b = _fold_bn(in_bn)
        entry["in_s"], entry["in_b"] = _pad_row(s, Kp), _pad_row(b, Kp)
    if out_bn is not None:
        s, b = _fold_bn(out_bn)
        entry["out_s"], entry["out_b"] = _pad_row(s, Np), _pad_row(b, Np)
        entry["epilogue"] = "bn_relu"
    elif out_bias is not None:
        entry["out_b"] = _pad_row(out_bias, Np)
        entry["epilogue"] = "bias"
    return entry


def prepare_params(params):
    bb = params["backbone"]
    prep = {"stem": _prep_conv(bb["conv0"], out_bn=bb["norm0"])}
    blocks = []
    for layers in bb["blocks"]:
        blk = []
        for lp in layers:
            blk.append(dict(
                c1=_prep_conv(lp["conv1"], in_bn=lp["norm1"], out_bn=lp["norm2"]),
                c2=_prep_conv(lp["conv2"]),
            ))
        blocks.append(blk)
    prep["blocks"] = blocks
    prep["transitions"] = [_prep_conv(tp["conv"], in_bn=tp["norm"])
                           for tp in bb["transitions"]]
    prep["norm5"] = _fold_bn(bb["norm5"])
    prep["classifier"] = _prep_conv(bb["classifier_w"][:, :, None, None],
                                    out_bias=bb["classifier_b"])
    prep["head"] = params["head"]
    return prep


# ------------------------------- forward --------------------------------------

def densenet169_plus_forward(prep, x_nchw):
    x = x_nchw.transpose(0, 2, 3, 1).astype(jnp.bfloat16)       # NHWC bf16
    # stem: conv7x7/2 (+fused norm0+ReLU) -> maxpool3x3/2
    x = conv_knk(x, prep["stem"], 7, 7, stride=2, padding=3)
    x = maxpool_3x3_s2_p1(x)
    # dense blocks + transitions (pre-activation BN+ReLU fused into the 1x1 matmul)
    for bi in range(len(BLOCK_CFG)):
        for lp in prep["blocks"][bi]:
            h = conv1x1(x, lp["c1"])                 # norm1+relu -> 1x1 -> norm2+relu
            h = conv_knk(h, lp["c2"], 3, 3, padding=1)   # 3x3, growth=32
            x = jnp.concatenate([x, h], axis=-1)     # channel concat (lane-contiguous)
        if bi != len(BLOCK_CFG) - 1:
            x = conv1x1(x, prep["transitions"][bi])  # trans-norm+relu -> 1x1 halve
            x = avgpool_2x2(x)
    # norm5 + ReLU, global average pool, classifier (bias fused), custom head
    n, h, w, c = x.shape
    s5, b5 = prep["norm5"]
    xf = bn_relu_rows(x.reshape(n * h * w, c), s5, b5)
    feat = xf.reshape(n, h * w, c).astype(jnp.float32).mean(axis=1)      # (n, 1664)
    logits = fused_matmul(feat.astype(jnp.bfloat16), prep["classifier"],
                          out_dtype=jnp.float32)                          # (n, 1000)
    return head_forward(prep["head"], logits)


if __name__ == "__main__":
    params = init_params(seed=0)
    prep = prepare_params(params)
    # small input consistent with densenet169 (needs >=32 spatial to reach 1x1 features)
    x = jax.random.normal(jax.random.PRNGKey(0), (2, 3, 32, 32), jnp.float32)
    out = densenet169_plus_forward(prep, x)
    out = jax.block_until_ready(out)
    assert out.shape == (2, 1), out.shape
    assert bool(jnp.all(jnp.isfinite(out)))
    print("KERNEL_OK")
</pallas_src>

<mosaic_0001>
module attributes {stable_mosaic.version = 11 : i64} {
  func.func @_fused_mm_kernel(%arg0: i32, %arg1: i32, %arg2: i32, %arg3: memref<256x256xbf16, #tpu.memory_space<vmem>>, %arg4: memref<256x128xbf16, #tpu.memory_space<vmem>>, %arg5: memref<1x256xf32, #tpu.memory_space<vmem>>, %arg6: memref<1x256xf32, #tpu.memory_space<vmem>>, %arg7: memref<1x128xf32, #tpu.memory_space<vmem>>, %arg8: memref<1x128xf32, #tpu.memory_space<vmem>>, %arg9: memref<256x128xbf16, #tpu.memory_space<vmem>>, %arg10: memref<256x128xf32, #tpu.memory_space<vmem>>) attributes {dimension_semantics = [#tpu.dimension_semantics<parallel>, #tpu.dimension_semantics<parallel>, #tpu.dimension_semantics<arbitrary>], iteration_bounds = array<i64: 2, 1, 1>, scalar_prefetch = 0 : i64, scratch_operands = 1 : i64, tpu.core_type = #tpu.core_type<tc>, window_params = [{transform_indices = @transform_0, window_bounds = array<i64: 256, 256>}, {transform_indices = @transform_1, window_bounds = array<i64: 256, 128>}, {transform_indices = @transform_2, window_bounds = array<i64: 1, 256>}, {transform_indices = @transform_3, window_bounds = array<i64: 1, 256>}, {transform_indices = @transform_4, window_bounds = array<i64: 1, 128>}, {transform_indices = @transform_5, window_bounds = array<i64: 1, 128>}, {transform_indices = @transform_6, window_bounds = array<i64: 256, 128>}]} {
    %c0_i32 = arith.constant 0 : i32
    %0 = arith.cmpi eq, %arg2, %c0_i32 : i32
    %1 = arith.extui %0 : i1 to i32
    %c0_i32_0 = arith.constant 0 : i32
    %2 = arith.cmpi ne, %1, %c0_i32_0 : i32
    scf.if %2 {
      %cst_10 = arith.constant 0.000000e+00 : f32
      %12 = vector.broadcast %cst_10 : f32 to vector<256x128xf32>
      %c0_11 = arith.constant 0 : index
      %c0_12 = arith.constant 0 : index
      %13 = vector.load %arg10[%c0_11, %c0_12] : memref<256x128xf32, #tpu.memory_space<vmem>>, vector<256x128xf32>
      tpu.vector_store %arg10[%c0_11, %c0_12], %12 {strides = array<i32>} : memref<256x128xf32, #tpu.memory_space<vmem>>, vector<256x128xf32>,
    } else {
    }
    %c0 = arith.constant 0 : index
    %c0_1 = arith.constant 0 : index
    %3 = vector.load %arg3[%c0, %c0_1] : memref<256x256xbf16, #tpu.memory_space<vmem>>, vector<256x256xbf16>
    %c0_2 = arith.constant 0 : index
    %c0_3 = arith.constant 0 : index
    %4 = vector.load %arg10[%c0_2, %c0_3] : memref<256x128xf32, #tpu.memory_space<vmem>>, vector<256x128xf32>
    %c0_4 = arith.constant 0 : index
    %c0_5 = arith.constant 0 : index
    %5 = vector.load %arg4[%c0_4, %c0_5] : memref<256x128xbf16, #tpu.memory_space<vmem>>, vector<256x128xbf16>
    %cst = arith.constant dense<0.000000e+00> : vector<256x128xf32>
    %6 = tpu.matmul %3, %5, %cst {dimension_numbers = #tpu.dot_dimension_numbers<[1], [0], [0], [1], [0, 0, 1, 1], [], []>} : vector<256x256xbf16>, vector<256x128xbf16>, vector<256x128xf32> -> vector<256x128xf32>
    %7 = arith.addf %4, %6 : vector<256x128xf32>
    %c0_6 = arith.constant 0 : index
    %c0_7 = arith.constant 0 : index
    %8 = vector.load %arg10[%c0_6, %c0_7] : memref<256x128xf32, #tpu.memory_space<vmem>>, vector<256x128xf32>
    tpu.vector_store %arg10[%c0_6, %c0_7], %7 {strides = array<i32>} : memref<256x128xf32, #tpu.memory_space<vmem>>, vector<256x128xf32>,
    %c0_i32_8 = arith.constant 0 : i32
    %9 = arith.cmpi eq, %arg2, %c0_i32_8 : i32
    %10 = arith.extui %9 : i1 to i32
    %c0_i32_9 = arith.constant 0 : i32
    %11 = arith.cmpi ne, %10, %c0_i32_9 : i32
    scf.if %11 {
      %c0_10 = arith.constant 0 : index
      %c0_11 = arith.constant 0 : index
      %12 = vector.load %arg10[%c0_10, %c0_11] : memref<256x128xf32, #tpu.memory_space<vmem>>, vector<256x128xf32>
      %c0_12 = arith.constant 0 : index
      %c0_13 = arith.constant 0 : index
      %13 = vector.load %arg7[%c0_12, %c0_13] : memref<1x128xf32, #tpu.memory_space<vmem>>, vector<1x128xf32>
      %14 = vector.broadcast %13 : vector<1x128xf32> to vector<256x128xf32>
      %15 = arith.mulf %12, %14 : vector<256x128xf32>
      %c0_14 = arith.constant 0 : index
      %c0_15 = arith.constant 0 : index
      %16 = vector.load %arg8[%c0_14, %c0_15] : memref<1x128xf32, #tpu.memory_space<vmem>>, vector<1x128xf32>
      %17 = vector.broadcast %16 : vector<1x128xf32> to vector<256x128xf32>
      %18 = arith.addf %15, %17 : vector<256x128xf32>
      %cst_16 = arith.constant 0.000000e+00 : f32
      %19 = vector.broadcast %cst_16 : f32 to vector<256x128xf32>
      %20 = arith.maximumf %18, %19 : vector<256x128xf32>
      %21 = arith.truncf %20 : vector<256x128xf32> to vector<256x128xbf16>
      %c0_17 = arith.constant 0 : index
      %c0_18 = arith.constant 0 : index
      %22 = vector.load %arg9[%c0_17, %c0_18] : memref<256x128xbf16, #tpu.memory_space<vmem>>, vector<256x128xbf16>
      tpu.vector_store %arg9[%c0_17, %c0_18], %21 {strides = array<i32>} : memref<256x128xbf16, #tpu.memory_space<vmem>>, vector<256x128xbf16>,
    } else {
    }
    return
  }
  func.func @transform_0(%arg0: i32, %arg1: i32, %arg2: i32) -> (i32, i32) {
    %c0_i32 = arith.constant 0 : i32
    return %arg0, %arg2 : i32, i32
  }
  func.func @transform_1(%arg0: i32, %arg1: i32, %arg2: i32) -> (i32, i32) {
    %c0_i32 = arith.constant 0 : i32
    return %arg2, %arg1 : i32, i32
  }
  func.func @transform_2(%arg0: i32, %arg1: i32, %arg2: i32) -> (i32, i32) {
    %c0_i32 = arith.constant 0 : i32
    %c0_i32_0 = arith.constant 0 : i32
    return %c0_i32, %arg2 : i32, i32
  }
  func.func @transform_3(%arg0: i32, %arg1: i32, %arg2: i32) -> (i32, i32) {
    %c0_i32 = arith.constant 0 : i32
    %c0_i32_0 = arith.constant 0 : i32
    return %c0_i32, %arg2 : i32, i32
  }
  func.func @transform_4(%arg0: i32, %arg1: i32, %arg2: i32) -> (i32, i32) {
    %c0_i32 = arith.constant 0 : i32
    %c0_i32_0 = arith.constant 0 : i32
    return %c0_i32, %arg1 : i32, i32
  }
  func.func @transform_5(%arg0: i32, %arg1: i32, %arg2: i32) -> (i32, i32) {
    %c0_i32 = arith.constant 0 : i32
    %c0_i32_0 = arith.constant 0 : i32
    return %c0_i32, %arg1 : i32, i32
  }
  func.func @transform_6(%arg0: i32, %arg1: i32, %arg2: i32) -> (i32, i32) {
    %c0_i32 = arith.constant 0 : i32
    return %arg0, %arg1 : i32, i32
  }
}

</mosaic_0001>

<llo_original>
// kernel: tpu_custom_call.1
$region0: #{tpu_custom_call.1}
  #allocation0 [shape = 'u32[]', space=smem, size = 0x4, offset = 0x4, fixed_abs, tag = 'smem constant byte address 0x4 - core index']
  #allocation1 [shape = 'u32[144,128]{1,0:T(1,128)}', space=vmem, size = 0x12000, scoped, tag = 'internal scratch']
  #allocation2 [shape = 'f32[256,128]{1,0:T(8,128)}', space=vmem, size = 0x20000, scoped, tag = 'scratch operand']
  %s0 = inlined_call_operand.hbm [shape: bf16[512,256], index: 0, kind: input, shape index: {}]
  %s1 = inlined_call_operand.hbm [shape: bf16[256,128], index: 1, kind: input, shape index: {}]
  %s2 = inlined_call_operand.vmem [shape: f32[1,256], index: 2, kind: input, shape index: {}]
  %s3 = inlined_call_operand.vmem [shape: f32[1,256], index: 3, kind: input, shape index: {}]
  %s4 = inlined_call_operand.vmem [shape: f32[1,128], index: 4, kind: input, shape index: {}]
  %s5 = inlined_call_operand.vmem [shape: f32[1,128], index: 5, kind: input, shape index: {}]
  %s6 = inlined_call_operand.hbm [shape: bf16[512,128], index: 6, kind: output, shape index: {}]
  %s7 = sld [smem:[#allocation0]]
  $region73: #{tpu_custom_call.1} parent=0
    _
  %s9 = ssub.s32 1, %s7
  %s10 = scalar_select 0, %s9, %s7
  $region1: #{tpu_custom_call.1} parent=0
    #allocation3 [shape = 'u8[262144]{0}', space=vmem, size = 0x40000, scoped, tag = 'input window, operand 0']
    #allocation4 [shape = 's32[2]{0}', space=sflag, size = 0x8, scoped, tag = 'scoped memory for tpu_custom_call.1']
    #allocation5 [shape = 's32[2]{0}', space=sflag, size = 0x8, scoped, tag = 'scoped memory for tpu_custom_call.1']
    #allocation6 [shape = 'u8[65536]{0}', space=vmem, size = 0x10000, scoped, tag = 'input window, operand 1, single buffered']
    #allocation7 [shape = 's32[1]{0}', space=sflag, size = 0x4, scoped, tag = 'scoped memory for tpu_custom_call.1']
    #allocation8 [shape = 'u8[131072]{0}', space=vmem, size = 0x20000, scoped, tag = 'output window, operand 0']
    %11 = vsyncpa [#allocation4], 0
    %s12 = scalar_lea.sflag [#allocation4], 1
    %13 = vsyncpa %s12, 0
    %14 = vsyncpa [#allocation7], 0
    %15 = vsyncpa [#allocation5], 0
    %s16 = scalar_lea.sflag [#allocation5], 1
    %17 = vsyncpa %s16, 0
    loop: start=0, step=1, limit=4
    $region2: #{tpu_custom_call.1} parent=1 // loop_pre_header
      _
    $region3: #{tpu_custom_call.1} parent=1 // loop_header
      %s19 = sphi 0, %s23
      %p20 = scmp.ge.s32.totalorder %s19, 4
      %s26 = sphi 0, %s45
      %s27 = sphi 0, %s41
      %s28 = sphi 0, %s37
      %s29 = sphi 0, %s26
      %s30 = sphi 0, %s27
      %s31 = sphi 0, %s28
      %s32 = sphi 0, %s29
      %s33 = sphi 0, %s30
      %s34 = sphi 0, %s31
      %s50 = sphi 0, %s52
      %s53 = sphi 0, %s50
      %s54 = sphi 0, %s53
      %s70 = sphi 0, %s54
      %s78 = sphi 0, %s80
      %s81 = sphi 0, %s78
      %s82 = sphi 0, %s81
      %s98 = sphi 0, %s82
      %s104 = sphi 0, %s106
      %s107 = sphi 0, %s104
      %s108 = sphi 0, %s107
      %s124 = sphi 0, %s108
      %s130 = sphi 0, %s132
      %s133 = sphi 0, %s130
      %s134 = sphi 0, %s133
      %s150 = sphi 0, %s134
      %s156 = sphi 0, %s158
      %s159 = sphi 0, %s156
      %s160 = sphi 0, %s159
      %s176 = sphi 0, %s160
      %s182 = sphi 0, %s184
      %s185 = sphi 0, %s182
      %s186 = sphi 0, %s185
      %s202 = sphi 0, %s186
      %s210 = sphi 0, %s212
      %s213 = sphi 0, %s210
      %s214 = sphi 0, %s213
      %s230 = sphi 0, %s214
    $region4: #{tpu_custom_call.1} parent=1 // loop_header_branch
      %22 = sbr.rel (%p20) target = $region8
    $region5: #{tpu_custom_call.1} parent=1 // loop_body
      %s24 = ssub.s32 %s19, 1
      %s25 = ssub.s32 %s19, 2
      %s35 = sadd.s32 1, %s28
      %p36 = scmp.ge.s32.totalorder %s35, 1
      %s37 = scalar_select %p36, 0, %s35
      %s38 = sadd.s32 1, %s27
      %s39 = scalar_select %p36, %s38, %s27
      %p40 = scmp.ge.s32.totalorder %s39, 1
      %s41 = scalar_select %p40, 0, %s39
      %s42 = sadd.s32 1, %s26
      %s43 = scalar_select %p40, %s42, %s26
      %p44 = scmp.ge.s32.totalorder %s43, 2
      %s45 = scalar_select %p44, 0, %s43
      %s46 = ssub.s32 %s26, %s45
      %s47 = ssub.s32 %s28, %s37
      %s48 = sor.u32 %s46, %s47
      %p49 = scmp.eq.s32.totalorder %s48, 0
      %s51 = sadd.s32 %s50, 1
      %s52 = scalar_select %p49, %s50, %s51
      %p55 = pneg %p49
      %p56 = scmp.eq.s32.totalorder %s19, 1
      %p57 = por %p55, %p56
      %p58 = scmp.ne.s32.totalorder %s50, %s53
      %p59 = scmp.eq.s32.totalorder %s19, 0
      %p60 = por %p58, %p59
      %p61 = scmp.ne.s32.totalorder %s50, %s53
      %p62 = scmp.eq.s32.totalorder %s24, 1
      %p63 = por %p61, %p62
      %p64 = scmp.ne.s32.totalorder %s53, %s54
      %p65 = scmp.eq.s32.totalorder %s24, 0
      %p66 = por %p64, %p65
      %p67 = scmp.ne.s32.totalorder %s53, %s54
      %p68 = scmp.eq.s32.totalorder %s25, 1
      %p69 = por %p67, %p68
      %p71 = scmp.ne.s32.totalorder %s54, %s70
      %p72 = scmp.eq.s32.totalorder %s25, 0
      %p73 = por %p71, %p72
      %s74 = ssub.s32 %s28, %s37
      %s75 = ssub.s32 %s27, %s41
      %s76 = sor.u32 %s74, %s75
      %p77 = scmp.eq.s32.totalorder %s76, 0
      %s79 = sadd.s32 %s78, 1
      %s80 = scalar_select %p77, %s78, %s79
      %p83 = pneg %p77
      %p84 = scmp.eq.s32.totalorder %s19, 1
      %p85 = por %p83, %p84
      %p86 = scmp.ne.s32.totalorder %s78, %s81
      %p87 = scmp.eq.s32.totalorder %s19, 0
      %p88 = por %p86, %p87
      %p89 = scmp.ne.s32.totalorder %s78, %s81
      %p90 = scmp.eq.s32.totalorder %s24, 1
      %p91 = por %p89, %p90
      %p92 = scmp.ne.s32.totalorder %s81, %s82
      %p93 = scmp.eq.s32.totalorder %s24, 0
      %p94 = por %p92, %p93
      %p95 = scmp.ne.s32.totalorder %s81, %s82
      %p96 = scmp.eq.s32.totalorder %s25, 1
      %p97 = por %p95, %p96
      %p99 = scmp.ne.s32.totalorder %s82, %s98
      %p100 = scmp.eq.s32.totalorder %s25, 0
      %p101 = por %p99, %p100
      %s102 = ssub.s32 %s28, %s37
      %p103 = scmp.eq.s32.totalorder %s102, 0
      %s105 = sadd.s32 %s104, 1
      %s106 = scalar_select %p103, %s104, %s105
      %p109 = pneg %p103
      %p110 = scmp.eq.s32.totalorder %s19, 1
      %p111 = por %p109, %p110
      %p112 = scmp.ne.s32.totalorder %s104, %s107
      %p113 = scmp.eq.s32.totalorder %s19, 0
      %p114 = por %p112, %p113
      %p115 = scmp.ne.s32.totalorder %s104, %s107
      %p116 = scmp.eq.s32.totalorder %s24, 1
      %p117 = por %p115, %p116
      %p118 = scmp.ne.s32.totalorder %s107, %s108
      %p119 = scmp.eq.s32.totalorder %s24, 0
      %p120 = por %p118, %p119
      %p121 = scmp.ne.s32.totalorder %s107, %s108
      %p122 = scmp.eq.s32.totalorder %s25, 1
      %p123 = por %p121, %p122
      %p125 = scmp.ne.s32.totalorder %s108, %s124
      %p126 = scmp.eq.s32.totalorder %s25, 0
      %p127 = por %p125, %p126
      %s128 = ssub.s32 %s28, %s37
      %p129 = scmp.eq.s32.totalorder %s128, 0
      %s131 = sadd.s32 %s130, 1
      %s132 = scalar_select %p129, %s130, %s131
      %p135 = pneg %p129
      %p136 = scmp.eq.s32.totalorder %s19, 1
      %p137 = por %p135, %p136
      %p138 = scmp.ne.s32.totalorder %s130, %s133
      %p139 = scmp.eq.s32.totalorder %s19, 0
      %p140 = por %p138, %p139
      %p141 = scmp.ne.s32.totalorder %s130, %s133
      %p142 = scmp.eq.s32.totalorder %s24, 1
      %p143 = por %p141, %p142
      %p144 = scmp.ne.s32.totalorder %s133, %s134
      %p145 = scmp.eq.s32.totalorder %s24, 0
      %p146 = por %p144, %p145
      %p147 = scmp.ne.s32.totalorder %s133, %s134
      %p148 = scmp.eq.s32.totalorder %s25, 1
      %p149 = por %p147, %p148
      %p151 = scmp.ne.s32.totalorder %s134, %s150
      %p152 = scmp.eq.s32.totalorder %s25, 0
      %p153 = por %p151, %p152
      %s154 = ssub.s32 %s27, %s41
      %p155 = scmp.eq.s32.totalorder %s154, 0
      %s157 = sadd.s32 %s156, 1
      %s158 = scalar_select %p155, %s156, %s157
      %p161 = pneg %p155
      %p162 = scmp.eq.s32.totalorder %s19, 1
      %p163 = por %p161, %p162
      %p164 = scmp.ne.s32.totalorder %s156, %s159
      %p165 = scmp.eq.s32.totalorder %s19, 0
      %p166 = por %p164, %p165
      %p167 = scmp.ne.s32.totalorder %s156, %s159
      %p168 = scmp.eq.s32.totalorder %s24, 1
      %p169 = por %p167, %p168
      %p170 = scmp.ne.s32.totalorder %s159, %s160
      %p171 = scmp.eq.s32.totalorder %s24, 0
      %p172 = por %p170, %p171
      %p173 = scmp.ne.s32.totalorder %s159, %s160
      %p174 = scmp.eq.s32.totalorder %s25, 1
      %p175 = por %p173, %p174
      %p177 = scmp.ne.s32.totalorder %s160, %s176
      %p178 = scmp.eq.s32.totalorder %s25, 0
      %p179 = por %p177, %p178
      %s180 = ssub.s32 %s27, %s41
      %p181 = scmp.eq.s32.totalorder %s180, 0
      %s183 = sadd.s32 %s182, 1
      %s184 = scalar_select %p181, %s182, %s183
      %p187 = pneg %p181
      %p188 = scmp.eq.s32.totalorder %s19, 1
      %p189 = por %p187, %p188
      %p190 = scmp.ne.s32.totalorder %s182, %s185
      %p191 = scmp.eq.s32.totalorder %s19, 0
      %p192 = por %p190, %p191
      %p193 = scmp.ne.s32.totalorder %s182, %s185
      %p194 = scmp.eq.s32.totalorder %s24, 1
      %p195 = por %p193, %p194
      %p196 = scmp.ne.s32.totalorder %s185, %s186
      %p197 = scmp.eq.s32.totalorder %s24, 0
      %p198 = por %p196, %p197
      %p199 = scmp.ne.s32.totalorder %s185, %s186
      %p200 = scmp.eq.s32.totalorder %s25, 1
      %p201 = por %p199, %p200
      %p203 = scmp.ne.s32.totalorder %s186, %s202
      %p204 = scmp.eq.s32.totalorder %s25, 0
      %p205 = por %p203, %p204
      %s206 = ssub.s32 %s26, %s45
      %s207 = ssub.s32 %s27, %s41
      %s208 = sor.u32 %s206, %s207
      %p209 = scmp.eq.s32.totalorder %s208, 0
      %s211 = sadd.s32 %s210, 1
      %s212 = scalar_select %p209, %s210, %s211
      %p215 = pneg %p209
      %p216 = scmp.eq.s32.totalorder %s19, 1
      %p217 = por %p215, %p216
      %p218 = scmp.ne.s32.totalorder %s210, %s213
      %p219 = scmp.eq.s32.totalorder %s19, 0
      %p220 = por %p218, %p219
      %p221 = scmp.ne.s32.totalorder %s210, %s213
      %p222 = scmp.eq.s32.totalorder %s24, 1
      %p223 = por %p221, %p222
      %p224 = scmp.ne.s32.totalorder %s213, %s214
      %p225 = scmp.eq.s32.totalorder %s24, 0
      %p226 = por %p224, %p225
      %p227 = scmp.ne.s32.totalorder %s213, %s214
      %p228 = scmp.eq.s32.totalorder %s25, 1
      %p229 = por %p227, %p228
      %p231 = scmp.ne.s32.totalorder %s214, %s230
      %p232 = scmp.eq.s32.totalorder %s25, 0
      %p233 = por %p231, %p232
      %p234 = scmp.le.s32.totalorder 1, %s19
      %p235 = scmp.lt.s32.totalorder %s19, 3
      %p236 = pnand %p234, %p235
      %p237 = pneg %p236
      // Predicated region
      $region9: #{tpu_custom_call.1} parent=5 // pred_check
        _
      $region10: #{tpu_custom_call.1} parent=5 // pred_check_branch
        %239 = sbr.rel (%p236) target = $region12
      $region11: #{tpu_custom_call.1} parent=5 // pred_region
        %s240 = ssub.s32 %s19, 1
        // Predicated region
        $region13: #{tpu_custom_call.1} parent=11 // pred_check
          %p241 = pneg %p94
        $region14: #{tpu_custom_call.1} parent=11 // pred_check_branch
          %243 = sbr.rel (%p241) target = $region16
        $region15: #{tpu_custom_call.1} parent=11 // pred_region
          %s244 = smul.u32 32, %s31
          %s246 = ssub.s32 2048, 2048
          %247 = vsyncadd [#allocation7], %s246
          %s248 = sadd.s32 %s30, %s244
          %s249 = smul.addr %s248, 64
          %s250 = scalar_lea.hbm %s1, %s249
          %s251 = sshll.u32 [#allocation6], 4
          %s252 = int_to_ptr.vmem [resolvable:$true] %s251
          %257 = dma.hbm_to_vmem [thread:$0]  %s250, 2048, %s252, [#allocation7], 64, 64, 4
        $region16: #{tpu_custom_call.1} parent=11 // pred_fallthru
          _
        // Predicated region
        $region17: #{tpu_custom_call.1} parent=11 // pred_check
          %p258 = pneg %p120
        $region18: #{tpu_custom_call.1} parent=11 // pred_check_branch
          %260 = sbr.rel (%p258) target = $region20
        $region19: #{tpu_custom_call.1} parent=11 // pred_region
          %s261 = smul.u32 2, %s31
          %p262 = scmp.lt.s32.totalorder %s261, 1
          %s263 = scalar_select %p262, %s261, 1
          %s264 = scalar_lea.vmem %s2, %s263
          %s265 = smul.u32 2, %s31
        $region20: #{tpu_custom_call.1} parent=11 // pred_fallthru
          _
        // Predicated region
        $region21: #{tpu_custom_call.1} parent=11 // pred_check
          %p266 = pneg %p146
        $region22: #{tpu_custom_call.1} parent=11 // pred_check_branch
          %268 = sbr.rel (%p266) target = $region24
        $region23: #{tpu_custom_call.1} parent=11 // pred_region
          %s269 = smul.u32 2, %s31
          %p270 = scmp.lt.s32.totalorder %s269, 1
          %s271 = scalar_select %p270, %s269, 1
          %s272 = scalar_lea.vmem %s3, %s271
          %s273 = smul.u32 2, %s31
        $region24: #{tpu_custom_call.1} parent=11 // pred_fallthru
          _
        // Predicated region
        $region25: #{tpu_custom_call.1} parent=11 // pred_check
          %p274 = pneg %p172
        $region26: #{tpu_custom_call.1} parent=11 // pred_check_branch
          %276 = sbr.rel (%p274) target = $region28
        $region27: #{tpu_custom_call.1} parent=11 // pred_region
          %p277 = scmp.lt.s32.totalorder %s30, 0
          %s278 = scalar_select %p277, %s30, 0
          %s279 = scalar_lea.vmem %s4, %s278
        $region28: #{tpu_custom_call.1} parent=11 // pred_fallthru
          _
        // Predicated region
        $region29: #{tpu_custom_call.1} parent=11 // pred_check
          %p280 = pneg %p198
        $region30: #{tpu_custom_call.1} parent=11 // pred_check_branch
          %282 = sbr.rel (%p280) target = $region32
        $region31: #{tpu_custom_call.1} parent=11 // pred_region
          %p283 = scmp.lt.s32.totalorder %s30, 0
          %s284 = scalar_select %p283, %s30, 0
          %s285 = scalar_lea.vmem %s5, %s284
        $region32: #{tpu_custom_call.1} parent=11 // pred_fallthru
          _
      $region12: #{tpu_custom_call.1} parent=5 // pred_fallthru
        _
      %p286 = scmp.lt.s32.totalorder %s19, 2
      // Predicated region
      $region33: #{tpu_custom_call.1} parent=5 // pred_check
        %p287 = pneg %p286
      $region34: #{tpu_custom_call.1} parent=5 // pred_check_branch
        %289 = sbr.rel (%p287) target = $region36
      $region35: #{tpu_custom_call.1} parent=5 // pred_region
        // Predicated region
        $region37: #{tpu_custom_call.1} parent=35 // pred_check
          %p290 = pneg %p60
        $region38: #{tpu_custom_call.1} parent=35 // pred_check_branch
          %292 = sbr.rel (%p290) target = $region40
        $region39: #{tpu_custom_call.1} parent=35 // pred_region
          %s293 = sand.u32 %s50, 1
          %s294 = scalar_lea.sflag [#allocation4], %s293
          %s295 = sand.u32 %s50, 1
          %s296 = smul.addr %s295, 256
          %s297 = scalar_lea.vmem [#allocation3], %s296
          %s298 = smul.u32 32, %s26
          %s299 = smul.u32 2, %s28
          %s301 = ssub.s32 4096, 4096
          %302 = vsyncadd %s294, %s301
          %s303 = smul.addr %s298, 2
          %s304 = sadd.s32 %s299, %s303
          %s305 = smul.addr %s304, 64
          %s306 = scalar_lea.hbm %s0, %s305
          %s307 = sshll.u32 %s297, 4
          %s308 = int_to_ptr.vmem [resolvable:$true] %s307
          %313 = dma.hbm_to_vmem [thread:$0]  %s306, 4096, %s308, %s294, 128, 128, 8
        $region40: #{tpu_custom_call.1} parent=35 // pred_fallthru
          _
      $region36: #{tpu_custom_call.1} parent=5 // pred_fallthru
        _
      %p314 = scmp.le.s32.totalorder 1, %s19
      %p315 = scmp.lt.s32.totalorder %s19, 3
      %p316 = pnand %p314, %p315
      %p317 = pneg %p316
      // Predicated region
      $region41: #{tpu_custom_call.1} parent=5 // pred_check
        _
      $region42: #{tpu_custom_call.1} parent=5 // pred_check_branch
        %319 = sbr.rel (%p316) target = $region44
      $region43: #{tpu_custom_call.1} parent=5 // pred_region
        %s320 = ssub.s32 %s19, 1
        %s321 = sand.u32 %s53, 1
        %s322 = scalar_lea.sflag [#allocation4], %s321
        %s323 = sand.u32 %s53, 1
        %s324 = smul.addr %s323, 256
        %s325 = scalar_lea.vmem [#allocation3], %s324
        // Predicated region
        $region45: #{tpu_custom_call.1} parent=43 // pred_check
          %p326 = pneg %p66
        $region46: #{tpu_custom_call.1} parent=43 // pred_check_branch
          %328 = sbr.rel (%p326) target = $region48
        $region47: #{tpu_custom_call.1} parent=43 // pred_region
          %329 = dma.done %s322, 4096
        $region48: #{tpu_custom_call.1} parent=43 // pred_fallthru
          _
        // Predicated region
        $region49: #{tpu_custom_call.1} parent=43 // pred_check
          %p330 = pneg %p94
        $region50: #{tpu_custom_call.1} parent=43 // pred_check_branch
          %332 = sbr.rel (%p330) target = $region52
        $region51: #{tpu_custom_call.1} parent=43 // pred_region
          %333 = dma.done [#allocation7], 2048
        $region52: #{tpu_custom_call.1} parent=43 // pred_fallthru
          _
        %s334 = sand.u32 %s53, 1
        %s335 = scalar_lea.sflag [#allocation4], %s334
        %s336 = sand.u32 %s53, 1
        %s337 = smul.addr %s336, 256
        %s338 = scalar_lea.vmem [#allocation3], %s337
        %p339 = pneg %p66
        %p340 = pneg %p63
        %p341 = pneg %p94
        %p342 = pneg %p91
        %s343 = smul.u32 2, %s31
        %p344 = scmp.lt.s32.totalorder %s343, 1
        %s345 = scalar_select %p344, %s343, 1
        %s346 = scalar_lea.vmem %s2, %s345
        %p347 = pneg %p120
        %p348 = pneg %p117
        %s349 = smul.u32 2, %s31
        %p350 = scmp.lt.s32.totalorder %s349, 1
        %s351 = scalar_select %p350, %s349, 1
        %s352 = scalar_lea.vmem %s3, %s351
        %p353 = pneg %p146
        %p354 = pneg %p143
        %p355 = scmp.lt.s32.totalorder %s30, 0
        %s356 = scalar_select %p355, %s30, 0
        %s357 = scalar_lea.vmem %s4, %s356
        %p358 = pneg %p172
        %p359 = pneg %p169
        %p360 = scmp.lt.s32.totalorder %s30, 0
        %s361 = scalar_select %p360, %s30, 0
        %s362 = scalar_lea.vmem %s5, %s361
        %p363 = pneg %p198
        %p364 = pneg %p195
        %p365 = pneg %p226
        %p366 = pneg %p223
        %s367 = sand.u32 %s213, 1
        %s368 = scalar_lea.sflag [#allocation5], %s367
        %s369 = sand.u32 %s213, 1
        %s370 = smul.addr %s369, 128
        %s371 = scalar_lea.vmem [#allocation8], %s370
        %s372 = smul.u32 32, %s29
        %s373 = smul.u32 2, %s31
        %s374 = smul.u32 32, %s31
        %s375 = smul.u32 2, %s31
        %p376 = scmp.lt.s32.totalorder %s375, 1
        %s377 = scalar_select %p376, %s375, 1
        %s378 = scalar_lea.vmem %s2, %s377
        %s379 = smul.u32 2, %s31
        %s380 = smul.u32 2, %s31
        %p381 = scmp.lt.s32.totalorder %s380, 1
        %s382 = scalar_select %p381, %s380, 1
        %s383 = scalar_lea.vmem %s3, %s382
        %s384 = smul.u32 2, %s31
        %p385 = scmp.lt.s32.totalorder %s30, 0
        %s386 = scalar_select %p385, %s30, 0
        %s387 = scalar_lea.vmem %s4, %s386
        %p388 = scmp.lt.s32.totalorder %s30, 0
        %s389 = scalar_select %p388, %s30, 0
        %s390 = scalar_lea.vmem %s5, %s389
        %s391 = smul.u32 32, %s29
        %p393 = scmp.eq.s32.totalorder %s31, 0
        // Predicated region
        $region53: #{tpu_custom_call.1} parent=43 // pred_check
          %p394 = pneg %p393
        $region54: #{tpu_custom_call.1} parent=43 // pred_check_branch
          %396 = sbr.rel (%p394) target = $region56
        $region55: #{tpu_custom_call.1} parent=43 // pred_region
          %397 = vst [vmem:[#allocation2] sm:$0xff] 0.0
          %398 = vst [vmem:[#allocation2 + $0x8] sm:$0xff] 0.0
          %399 = vst [vmem:[#allocation2 + $0x10] sm:$0xff] 0.0
          %400 = vst [vmem:[#allocation2 + $0x18] sm:$0xff] 0.0
          %401 = vst [vmem:[#allocation2 + $0x20] sm:$0xff] 0.0
          %402 = vst [vmem:[#allocation2 + $0x28] sm:$0xff] 0.0
          %403 = vst [vmem:[#allocation2 + $0x30] sm:$0xff] 0.0
          %404 = vst [vmem:[#allocation2 + $0x38] sm:$0xff] 0.0
          %405 = vst [vmem:[#allocation2 + $0x40] sm:$0xff] 0.0
          %406 = vst [vmem:[#allocation2 + $0x48] sm:$0xff] 0.0
          %407 = vst [vmem:[#allocation2 + $0x50] sm:$0xff] 0.0
          %408 = vst [vmem:[#allocation2 + $0x58] sm:$0xff] 0.0
          %409 = vst [vmem:[#allocation2 + $0x60] sm:$0xff] 0.0
          %410 = vst [vmem:[#allocation2 + $0x68] sm:$0xff] 0.0
          %411 = vst [vmem:[#allocation2 + $0x70] sm:$0xff] 0.0
          %412 = vst [vmem:[#allocation2 + $0x78] sm:$0xff] 0.0
          %413 = vst [vmem:[#allocation2 + $0x80] sm:$0xff] 0.0
          %414 = vst [vmem:[#allocation2 + $0x88] sm:$0xff] 0.0
          %415 = vst [vmem:[#allocation2 + $0x90] sm:$0xff] 0.0
          %416 = vst [vmem:[#allocation2 + $0x98] sm:$0xff] 0.0
          %417 = vst [vmem:[#allocation2 + $0xa0] sm:$0xff] 0.0
          %418 = vst [vmem:[#allocation2 + $0xa8] sm:$0xff] 0.0
          %419 = vst [vmem:[#allocation2 + $0xb0] sm:$0xff] 0.0
          %420 = vst [vmem:[#allocation2 + $0xb8] sm:$0xff] 0.0
          %421 = vst [vmem:[#allocation2 + $0xc0] sm:$0xff] 0.0
          %422 = vst [vmem:[#allocation2 + $0xc8] sm:$0xff] 0.0
          %423 = vst [vmem:[#allocation2 + $0xd0] sm:$0xff] 0.0
          %424 = vst [vmem:[#allocation2 + $0xd8] sm:$0xff] 0.0
          %425 = vst [vmem:[#allocation2 + $0xe0] sm:$0xff] 0.0
          %426 = vst [vmem:[#allocation2 + $0xe8] sm:$0xff] 0.0
          %427 = vst [vmem:[#allocation2 + $0xf0] sm:$0xff] 0.0
          %428 = vst [vmem:[#allocation2 + $0xf8] sm:$0xff] 0.0
        $region56: #{tpu_custom_call.1} parent=43 // pred_fallthru
          _
        %v429 = vld [vmem:[%s325] sm:$0xff]
        %v430 = vld [vmem:[%s325 + $0x8] sm:$0xff]
        %v431 = vld [vmem:[%s325 + $0x10] sm:$0xff]
        %v432 = vld [vmem:[%s325 + $0x18] sm:$0xff]
        %v433 = vld [vmem:[%s325 + $0x20] sm:$0xff]
        %v434 = vld [vmem:[%s325 + $0x28] sm:$0xff]
        %v435 = vld [vmem:[%s325 + $0x30] sm:$0xff]
        %v436 = vld [vmem:[%s325 + $0x38] sm:$0xff]
        %v437 = vld [vmem:[%s325 + $0x40] sm:$0xff]
        %v438 = vld [vmem:[%s325 + $0x48] sm:$0xff]
        %v439 = vld [vmem:[%s325 + $0x50] sm:$0xff]
        %v440 = vld [vmem:[%s325 + $0x58] sm:$0xff]
        %v441 = vld [vmem:[%s325 + $0x60] sm:$0xff]
        %v442 = vld [vmem:[%s325 + $0x68] sm:$0xff]
        %v443 = vld [vmem:[%s325 + $0x70] sm:$0xff]
        %v444 = vld [vmem:[%s325 + $0x78] sm:$0xff]
        %v445 = vld [vmem:[%s325 + $0x80] sm:$0xff]
        %v446 = vld [vmem:[%s325 + $0x88] sm:$0xff]
        %v447 = vld [vmem:[%s325 + $0x90] sm:$0xff]
        %v448 = vld [vmem:[%s325 + $0x98] sm:$0xff]
        %v449 = vld [vmem:[%s325 + $0xa0] sm:$0xff]
        %v450 = vld [vmem:[%s325 + $0xa8] sm:$0xff]
        %v451 = vld [vmem:[%s325 + $0xb0] sm:$0xff]
        %v452 = vld [vmem:[%s325 + $0xb8] sm:$0xff]
        %v453 = vld [vmem:[%s325 + $0xc0] sm:$0xff]
        %v454 = vld [vmem:[%s325 + $0xc8] sm:$0xff]
        %v455 = vld [vmem:[%s325 + $0xd0] sm:$0xff]
        %v456 = vld [vmem:[%s325 + $0xd8] sm:$0xff]
        %v457 = vld [vmem:[%s325 + $0xe0] sm:$0xff]
        %v458 = vld [vmem:[%s325 + $0xe8] sm:$0xff]
        %v459 = vld [vmem:[%s325 + $0xf0] sm:$0xff]
        %v460 = vld [vmem:[%s325 + $0xf8] sm:$0xff]
        %v461 = vld [vmem:[#allocation2] sm:$0xff]
        %v462 = vld [vmem:[#allocation2 + $0x8] sm:$0xff]
        %v463 = vld [vmem:[#allocation2 + $0x10] sm:$0xff]
        %v464 = vld [vmem:[#allocation2 + $0x18] sm:$0xff]
        %v465 = vld [vmem:[#allocation2 + $0x20] sm:$0xff]
        %v466 = vld [vmem:[#allocation2 + $0x28] sm:$0xff]
        %v467 = vld [vmem:[#allocation2 + $0x30] sm:$0xff]
        %v468 = vld [vmem:[#allocation2 + $0x38] sm:$0xff]
        %v469 = vld [vmem:[#allocation2 + $0x40] sm:$0xff]
        %v470 = vld [vmem:[#allocation2 + $0x48] sm:$0xff]
        %v471 = vld [vmem:[#allocation2 + $0x50] sm:$0xff]
        %v472 = vld [vmem:[#allocation2 + $0x58] sm:$0xff]
        %v473 = vld [vmem:[#allocation2 + $0x60] sm:$0xff]
        %v474 = vld [vmem:[#allocation2 + $0x68] sm:$0xff]
        %v475 = vld [vmem:[#allocation2 + $0x70] sm:$0xff]
        %v476 = vld [vmem:[#allocation2 + $0x78] sm:$0xff]
        %v477 = vld [vmem:[#allocation2 + $0x80] sm:$0xff]
        %v478 = vld [vmem:[#allocation2 + $0x88] sm:$0xff]
        %v479 = vld [vmem:[#allocation2 + $0x90] sm:$0xff]
        %v480 = vld [vmem:[#allocation2 + $0x98] sm:$0xff]
        %v481 = vld [vmem:[#allocation2 + $0xa0] sm:$0xff]
        %v482 = vld [vmem:[#allocation2 + $0xa8] sm:$0xff]
        %v483 = vld [vmem:[#allocation2 + $0xb0] sm:$0xff]
        %v484 = vld [vmem:[#allocation2 + $0xb8] sm:$0xff]
        %v485 = vld [vmem:[#allocation2 + $0xc0] sm:$0xff]
        %v486 = vld [vmem:[#allocation2 + $0xc8] sm:$0xff]
        %v487 = vld [vmem:[#allocation2 + $0xd0] sm:$0xff]
        %v488 = vld [vmem:[#allocation2 + $0xd8] sm:$0xff]
        %v489 = vld [vmem:[#allocation2 + $0xe0] sm:$0xff]
        %v490 = vld [vmem:[#allocation2 + $0xe8] sm:$0xff]
        %v491 = vld [vmem:[#allocation2 + $0xf0] sm:$0xff]
        %v492 = vld [vmem:[#allocation2 + $0xf8] sm:$0xff]
        %v493 = vld [vmem:[#allocation6] sm:$0xf]
        %v494 = vld [vmem:[#allocation6 + $0x4] sm:$0xf]
        %v495 = vld [vmem:[#allocation6 + $0x8] sm:$0xf]
        %v496 = vld [vmem:[#allocation6 + $0xc] sm:$0xf]
        %v497 = vld [vmem:[#allocation6 + $0x10] sm:$0xf]
        %v498 = vld [vmem:[#allocation6 + $0x14] sm:$0xf]
        %v499 = vld [vmem:[#allocation6 + $0x18] sm:$0xf]
        %v500 = vld [vmem:[#allocation6 + $0x1c] sm:$0xf]
        %v501 = vld [vmem:[#allocation6 + $0x20] sm:$0xf]
        %v502 = vld [vmem:[#allocation6 + $0x24] sm:$0xf]
        %v503 = vld [vmem:[#allocation6 + $0x28] sm:$0xf]
        %v504 = vld [vmem:[#allocation6 + $0x2c] sm:$0xf]
        %v505 = vld [vmem:[#allocation6 + $0x30] sm:$0xf]
        %v506 = vld [vmem:[#allocation6 + $0x34] sm:$0xf]
        %v507 = vld [vmem:[#allocation6 + $0x38] sm:$0xf]
        %v508 = vld [vmem:[#allocation6 + $0x3c] sm:$0xf]
        %v509 = vld [vmem:[#allocation6 + $0x40] sm:$0xf]
        %v510 = vld [vmem:[#allocation6 + $0x44] sm:$0xf]
        %v511 = vld [vmem:[#allocation6 + $0x48] sm:$0xf]
        %v512 = vld [vmem:[#allocation6 + $0x4c] sm:$0xf]
        %v513 = vld [vmem:[#allocation6 + $0x50] sm:$0xf]
        %v514 = vld [vmem:[#allocation6 + $0x54] sm:$0xf]
        %v515 = vld [vmem:[#allocation6 + $0x58] sm:$0xf]
        %v516 = vld [vmem:[#allocation6 + $0x5c] sm:$0xf]
        %v517 = vld [vmem:[#allocation6 + $0x60] sm:$0xf]
        %v518 = vld [vmem:[#allocation6 + $0x64] sm:$0xf]
        %v519 = vld [vmem:[#allocation6 + $0x68] sm:$0xf]
        %v520 = vld [vmem:[#allocation6 + $0x6c] sm:$0xf]
        %v521 = vld [vmem:[#allocation6 + $0x70] sm:$0xf]
        %v522 = vld [vmem:[#allocation6 + $0x74] sm:$0xf]
        %v523 = vld [vmem:[#allocation6 + $0x78] sm:$0xf]
        %v524 = vld [vmem:[#allocation6 + $0x7c] sm:$0xf]
        %v557 = vunpack.c.l.b16 %v429
        %v558 = vunpack.c.h.b16 %v429
        %v559 = vunpack.c.l.b16 %v430
        %v560 = vunpack.c.h.b16 %v430
        %v561 = vunpack.c.l.b16 %v431
        %v562 = vunpack.c.h.b16 %v431
        %v563 = vunpack.c.l.b16 %v432
        %v564 = vunpack.c.h.b16 %v432
        %v565 = vunpack.c.l.b16 %v433
        %v566 = vunpack.c.h.b16 %v433
        %v567 = vunpack.c.l.b16 %v434
        %v568 = vunpack.c.h.b16 %v434
        %v569 = vunpack.c.l.b16 %v435
        %v570 = vunpack.c.h.b16 %v435
        %v571 = vunpack.c.l.b16 %v436
        %v572 = vunpack.c.h.b16 %v436
        %v573 = vunpack.c.l.b16 %v437
        %v574 = vunpack.c.h.b16 %v437
        %v575 = vunpack.c.l.b16 %v438
        %v576 = vunpack.c.h.b16 %v438
        %v577 = vunpack.c.l.b16 %v439
        %v578 = vunpack.c.h.b16 %v439
        %v579 = vunpack.c.l.b16 %v440
        %v580 = vunpack.c.h.b16 %v440
        %v581 = vunpack.c.l.b16 %v441
        %v582 = vunpack.c.h.b16 %v441
        %v583 = vunpack.c.l.b16 %v442
        %v584 = vunpack.c.h.b16 %v442
        %v585 = vunpack.c.l.b16 %v443
        %v586 = vunpack.c.h.b16 %v443
        %v587 = vunpack.c.l.b16 %v444
        %v588 = vunpack.c.h.b16 %v444
        %v589 = vunpack.c.l.b16 %v445
        %v590 = vunpack.c.h.b16 %v445
        %v591 = vunpack.c.l.b16 %v446
        %v592 = vunpack.c.h.b16 %v446
        %v593 = vunpack.c.l.b16 %v447
        %v594 = vunpack.c.h.b16 %v447
        %v595 = vunpack.c.l.b16 %v448
        %v596 = vunpack.c.h.b16 %v448
        %v597 = vunpack.c.l.b16 %v449
        %v598 = vunpack.c.h.b16 %v449
        %v599 = vunpack.c.l.b16 %v450
        %v600 = vunpack.c.h.b16 %v450
        %v601 = vunpack.c.l.b16 %v451
        %v602 = vunpack.c.h.b16 %v451
        %v603 = vunpack.c.l.b16 %v452
        %v604 = vunpack.c.h.b16 %v452
        %v605 = vunpack.c.l.b16 %v453
        %v606 = vunpack.c.h.b16 %v453
        %v607 = vunpack.c.l.b16 %v454
        %v608 = vunpack.c.h.b16 %v454
        %v609 = vunpack.c.l.b16 %v455
        %v610 = vunpack.c.h.b16 %v455
        %v611 = vunpack.c.l.b16 %v456
        %v612 = vunpack.c.h.b16 %v456
        %v613 = vunpack.c.l.b16 %v457
        %v614 = vunpack.c.h.b16 %v457
        %v615 = vunpack.c.l.b16 %v458
        %v616 = vunpack.c.h.b16 %v458
        %v617 = vunpack.c.l.b16 %v459
        %v618 = vunpack.c.h.b16 %v459
        %v619 = vunpack.c.l.b16 %v460
        %v620 = vunpack.c.h.b16 %v460
        %v621 = vpack.c.b16 %v559, %v557
        %v622 = vpack.c.b16 %v560, %v558
        %v623 = vpack.c.b16 %v563, %v561
        %v624 = vpack.c.b16 %v564, %v562
        %v625 = vpack.c.b16 %v567, %v565
        %v626 = vpack.c.b16 %v568, %v566
        %v627 = vpack.c.b16 %v571, %v569
        %v628 = vpack.c.b16 %v572, %v570
        %v629 = vpack.c.b16 %v575, %v573
        %v630 = vpack.c.b16 %v576, %v574
        %v631 = vpack.c.b16 %v579, %v577
        %v632 = vpack.c.b16 %v580, %v578
        %v633 = vpack.c.b16 %v583, %v581
        %v634 = vpack.c.b16 %v584, %v582
        %v635 = vpack.c.b16 %v587, %v585
        %v636 = vpack.c.b16 %v588, %v586
        %v637 = vpack.c.b16 %v591, %v589
        %v638 = vpack.c.b16 %v592, %v590
        %v639 = vpack.c.b16 %v595, %v593
        %v640 = vpack.c.b16 %v596, %v594
        %v641 = vpack.c.b16 %v599, %v597
        %v642 = vpack.c.b16 %v600, %v598
        %v643 = vpack.c.b16 %v603, %v601
        %v644 = vpack.c.b16 %v604, %v602
        %v645 = vpack.c.b16 %v607, %v605
        %v646 = vpack.c.b16 %v608, %v606
        %v647 = vpack.c.b16 %v611, %v609
        %v648 = vpack.c.b16 %v612, %v610
        %v649 = vpack.c.b16 %v615, %v613
        %v650 = vpack.c.b16 %v616, %v614
        %v651 = vpack.c.b16 %v619, %v617
        %v652 = vpack.c.b16 %v620, %v618
        %v717 = vunpack.c.l.b16 %v493
        %v718 = vunpack.c.l.b16 %v494
        %v719 = vunpack.c.l.b16 %v495
        %v720 = vunpack.c.l.b16 %v496
        %v721 = vunpack.c.l.b16 %v497
        %v722 = vunpack.c.l.b16 %v498
        %v723 = vunpack.c.l.b16 %v499
        %v724 = vunpack.c.l.b16 %v500
        %v725 = vunpack.c.l.b16 %v501
        %v726 = vunpack.c.l.b16 %v502
        %v727 = vunpack.c.l.b16 %v503
        %v728 = vunpack.c.l.b16 %v504
        %v729 = vunpack.c.l.b16 %v505
        %v730 = vunpack.c.l.b16 %v506
        %v731 = vunpack.c.l.b16 %v507
        %v732 = vunpack.c.l.b16 %v508
        %v733 = vunpack.c.l.b16 %v509
        %v734 = vunpack.c.l.b16 %v510
        %v735 = vunpack.c.l.b16 %v511
        %v736 = vunpack.c.l.b16 %v512
        %v737 = vunpack.c.l.b16 %v513
        %v738 = vunpack.c.l.b16 %v514
        %v739 = vunpack.c.l.b16 %v515
        %v740 = vunpack.c.l.b16 %v516
        %v741 = vunpack.c.l.b16 %v517
        %v742 = vunpack.c.l.b16 %v518
        %v743 = vunpack.c.l.b16 %v519
        %v744 = vunpack.c.l.b16 %v520
        %v745 = vunpack.c.l.b16 %v521
        %v746 = vunpack.c.l.b16 %v522
        %v747 = vunpack.c.l.b16 %v523
        %v748 = vunpack.c.l.b16 %v524
        %v749 = vpack.c.b16 %v718, %v717
        %v750 = vpack.c.b16 %v720, %v719
        %v751 = vpack.c.b16 %v722, %v721
        %v752 = vpack.c.b16 %v724, %v723
        %v753 = vpack.c.b16 %v726, %v725
        %v754 = vpack.c.b16 %v728, %v727
        %v755 = vpack.c.b16 %v730, %v729
        %v756 = vpack.c.b16 %v732, %v731
        %v757 = vpack.c.b16 %v734, %v733
        %v758 = vpack.c.b16 %v736, %v735
        %v759 = vpack.c.b16 %v738, %v737
        %v760 = vpack.c.b16 %v740, %v739
        %v761 = vpack.c.b16 %v742, %v741
        %v762 = vpack.c.b16 %v744, %v743
        %v763 = vpack.c.b16 %v746, %v745
        %v764 = vpack.c.b16 %v748, %v747
        %781 = vmatprep.subr.bf16.mxu0 0
        %782 = vmatpush1.bf16.msra.mxu0 %v756
        %783 = vmatprep.subr.bf16.mxu0 0
        %784 = vmatpush1.bf16.msra.mxu0 %v755
        %785 = vmatprep.subr.bf16.mxu0 0
        %786 = vmatpush1.bf16.msra.mxu0 %v754
        %787 = vmatprep.subr.bf16.mxu0 0
        %788 = vmatpush1.bf16.msra.mxu0 %v753
        %789 = vmatprep.subr.bf16.mxu0 0
        %790 = vmatpush1.bf16.msra.mxu0 %v752
        %791 = vmatprep.subr.bf16.mxu0 0
        %792 = vmatpush1.bf16.msra.mxu0 %v751
        %793 = vmatprep.subr.bf16.mxu0 0
        %794 = vmatpush1.bf16.msra.mxu0 %v750
        %795 = vmatprep.subr.bf16.mxu0 0
        %796 = vmatpush1.bf16.msra.mxu0 %v749
        %797 = vmatprep.subr.bf16.mxu0 0
        %798 = vmatpush2.bf16.msra.mxu0 %v764
        %799 = vmatprep.subr.bf16.mxu0 0
        %800 = vmatpush2.bf16.msra.mxu0 %v763
        %801 = vmatprep.subr.bf16.mxu0 0
        %802 = vmatpush2.bf16.msra.mxu0 %v762
        %803 = vmatprep.subr.bf16.mxu0 0
        %804 = vmatpush2.bf16.msra.mxu0 %v761
        %805 = vmatprep.subr.bf16.mxu0 0
        %806 = vmatpush2.bf16.msra.mxu0 %v760
        %807 = vmatprep.subr.bf16.mxu0 0
        %808 = vmatpush2.bf16.msra.mxu0 %v759
        %809 = vmatprep.subr.bf16.mxu0 0
        %810 = vmatpush2.bf16.msra.mxu0 %v758
        %811 = vmatprep.subr.bf16.mxu0 0
        %812 = vmatpush2.bf16.msra.mxu0 %v757
        %813 = vmatprep.mubr.bf16.mxu0 %v622
        %814 = vmatmul.mubr.bf16.gmra.mxu0 %v621
        %v815 = vpop.f32.mrf.mxu0
        %v816 = vadd.f32 0.0, %v815
        %v817 = vpop.f32.mrf.mxu0
        %v818 = vpop.f32.mrf.mxu0
        %v819 = vadd.f32 0.0, %v818
        %v820 = vpop.f32.mrf.mxu0
        %821 = vmatprep.mubr.bf16.mxu0 %v624
        %822 = vmatmul.mubr.bf16.gmra.mxu0 %v623
        %v823 = vpop.f32.mrf.mxu0
        %v824 = vadd.f32 0.0, %v823
        %v825 = vpop.f32.mrf.mxu0
        %v826 = vpop.f32.mrf.mxu0
        %v827 = vadd.f32 0.0, %v826
        %v828 = vpop.f32.mrf.mxu0
        %829 = vmatprep.mubr.bf16.mxu0 %v626
        %830 = vmatmul.mubr.bf16.gmra.mxu0 %v625
        %v831 = vpop.f32.mrf.mxu0
        %v832 = vadd.f32 0.0, %v831
        %v833 = vpop.f32.mrf.mxu0
        %v834 = vpop.f32.mrf.mxu0
        %v835 = vadd.f32 0.0, %v834
        %v836 = vpop.f32.mrf.mxu0
        %837 = vmatprep.mubr.bf16.mxu0 %v628
        %838 = vmatmul.mubr.bf16.gmra.mxu0 %v627
        %v839 = vpop.f32.mrf.mxu0
        %v840 = vadd.f32 0.0, %v839
        %v841 = vpop.f32.mrf.mxu0
        %v842 = vpop.f32.mrf.mxu0
        %v843 = vadd.f32 0.0, %v842
        %v844 = vpop.f32.mrf.mxu0
        %845 = vmatprep.mubr.bf16.mxu0 %v630
        %846 = vmatmul.mubr.bf16.gmra.mxu0 %v629
        %v847 = vpop.f32.mrf.mxu0
        %v848 = vadd.f32 0.0, %v847
        %v849 = vpop.f32.mrf.mxu0
        %v850 = vpop.f32.mrf.mxu0
        %v851 = vadd.f32 0.0, %v850
        %v852 = vpop.f32.mrf.mxu0
        %853 = vmatprep.mubr.bf16.mxu0 %v632
        %854 = vmatmul.mubr.bf16.gmra.mxu0 %v631
        %v855 = vpop.f32.mrf.mxu0
        %v856 = vadd.f32 0.0, %v855
        %v857 = vpop.f32.mrf.mxu0
        %v858 = vpop.f32.mrf.mxu0
        %v859 = vadd.f32 0.0, %v858
        %v860 = vpop.f32.mrf.mxu0
        %861 = vmatprep.mubr.bf16.mxu0 %v634
        %862 = vmatmul.mubr.bf16.gmra.mxu0 %v633
        %v863 = vpop.f32.mrf.mxu0
        %v864 = vadd.f32 0.0, %v863
        %v865 = vpop.f32.mrf.mxu0
        %v866 = vpop.f32.mrf.mxu0
        %v867 = vadd.f32 0.0, %v866
        %v868 = vpop.f32.mrf.mxu0
        %869 = vmatprep.mubr.bf16.mxu0 %v636
        %870 = vmatmul.mubr.bf16.gmra.mxu0 %v635
        %v871 = vpop.f32.mrf.mxu0
        %v872 = vadd.f32 0.0, %v871
        %v873 = vpop.f32.mrf.mxu0
        %v874 = vpop.f32.mrf.mxu0
        %v875 = vadd.f32 0.0, %v874
        %v876 = vpop.f32.mrf.mxu0
        %877 = vmatprep.mubr.bf16.mxu0 %v638
        %878 = vmatmul.mubr.bf16.gmra.mxu0 %v637
        %v879 = vpop.f32.mrf.mxu0
        %v880 = vadd.f32 0.0, %v879
        %v881 = vpop.f32.mrf.mxu0
        %v882 = vpop.f32.mrf.mxu0
        %v883 = vadd.f32 0.0, %v882
        %v884 = vpop.f32.mrf.mxu0
        %885 = vmatprep.mubr.bf16.mxu0 %v640
        %886 = vmatmul.mubr.bf16.gmra.mxu0 %v639
        %v887 = vpop.f32.mrf.mxu0
        %v888 = vadd.f32 0.0, %v887
        %v889 = vpop.f32.mrf.mxu0
        %v890 = vpop.f32.mrf.mxu0
        %v891 = vadd.f32 0.0, %v890
        %v892 = vpop.f32.mrf.mxu0
        %893 = vmatprep.mubr.bf16.mxu0 %v642
        %894 = vmatmul.mubr.bf16.gmra.mxu0 %v641
        %v895 = vpop.f32.mrf.mxu0
        %v896 = vadd.f32 0.0, %v895
        %v897 = vpop.f32.mrf.mxu0
        %v898 = vpop.f32.mrf.mxu0
        %v899 = vadd.f32 0.0, %v898
        %v900 = vpop.f32.mrf.mxu0
        %901 = vmatprep.mubr.bf16.mxu0 %v644
        %902 = vmatmul.mubr.bf16.gmra.mxu0 %v643
        %v903 = vpop.f32.mrf.mxu0
        %v904 = vadd.f32 0.0, %v903
        %v905 = vpop.f32.mrf.mxu0
        %v906 = vpop.f32.mrf.mxu0
        %v907 = vadd.f32 0.0, %v906
        %v908 = vpop.f32.mrf.mxu0
        %909 = vmatprep.mubr.bf16.mxu0 %v646
        %910 = vmatmul.mubr.bf16.gmra.mxu0 %v645
        %v911 = vpop.f32.mrf.mxu0
        %v912 = vadd.f32 0.0, %v911
        %v913 = vpop.f32.mrf.mxu0
        %v914 = vpop.f32.mrf.mxu0
        %v915 = vadd.f32 0.0, %v914
        %v916 = vpop.f32.mrf.mxu0
        %917 = vmatprep.mubr.bf16.mxu0 %v648
        %918 = vmatmul.mubr.bf16.gmra.mxu0 %v647
        %v919 = vpop.f32.mrf.mxu0
        %v920 = vadd.f32 0.0, %v919
        %v921 = vpop.f32.mrf.mxu0
        %v922 = vpop.f32.mrf.mxu0
        %v923 = vadd.f32 0.0, %v922
        %v924 = vpop.f32.mrf.mxu0
        %925 = vmatprep.mubr.bf16.mxu0 %v650
        %926 = vmatmul.mubr.bf16.gmra.mxu0 %v649
        %v927 = vpop.f32.mrf.mxu0
        %v928 = vadd.f32 0.0, %v927
        %v929 = vpop.f32.mrf.mxu0
        %v930 = vpop.f32.mrf.mxu0
        %v931 = vadd.f32 0.0, %v930
        %v932 = vpop.f32.mrf.mxu0
        %933 = vmatprep.mubr.bf16.mxu0 %v652
        %934 = vmatmul.mubr.bf16.gmra.mxu0 %v651
        %v935 = vpop.f32.mrf.mxu0
        %v936 = vadd.f32 0.0, %v935
        %v937 = vpop.f32.mrf.mxu0
        %v938 = vpop.f32.mrf.mxu0
        %v939 = vadd.f32 0.0, %v938
        %v940 = vpop.f32.mrf.mxu0
        %941 = vdwg.mxu0
        %v942 = vadd.f32 %v461, %v816
        %v943 = vadd.f32 %v462, %v819
        %v944 = vadd.f32 %v463, %v824
        %v945 = vadd.f32 %v464, %v827
        %v946 = vadd.f32 %v465, %v832
        %v947 = vadd.f32 %v466, %v835
        %v948 = vadd.f32 %v467, %v840
        %v949 = vadd.f32 %v468, %v843
        %v950 = vadd.f32 %v469, %v848
        %v951 = vadd.f32 %v470, %v851
        %v952 = vadd.f32 %v471, %v856
        %v953 = vadd.f32 %v472, %v859
        %v954 = vadd.f32 %v473, %v864
        %v955 = vadd.f32 %v474, %v867
        %v956 = vadd.f32 %v475, %v872
        %v957 = vadd.f32 %v476, %v875
        %v958 = vadd.f32 %v477, %v880
        %v959 = vadd.f32 %v478, %v883
        %v960 = vadd.f32 %v479, %v888
        %v961 = vadd.f32 %v480, %v891
        %v962 = vadd.f32 %v481, %v896
        %v963 = vadd.f32 %v482, %v899
        %v964 = vadd.f32 %v483, %v904
        %v965 = vadd.f32 %v484, %v907
        %v966 = vadd.f32 %v485, %v912
        %v967 = vadd.f32 %v486, %v915
        %v968 = vadd.f32 %v487, %v920
        %v969 = vadd.f32 %v488, %v923
        %v970 = vadd.f32 %v489, %v928
        %v971 = vadd.f32 %v490, %v931
        %v972 = vadd.f32 %v491, %v936
        %v973 = vadd.f32 %v492, %v939
        %974 = vst [vmem:[#allocation2] sm:$0xff] %v942
        %975 = vst [vmem:[#allocation2 + $0x8] sm:$0xff] %v943
        %976 = vst [vmem:[#allocation2 + $0x10] sm:$0xff] %v944
        %977 = vst [vmem:[#allocation2 + $0x18] sm:$0xff] %v945
        %978 = vst [vmem:[#allocation2 + $0x20] sm:$0xff] %v946
        %979 = vst [vmem:[#allocation2 + $0x28] sm:$0xff] %v947
        %980 = vst [vmem:[#allocation2 + $0x30] sm:$0xff] %v948
        %981 = vst [vmem:[#allocation2 + $0x38] sm:$0xff] %v949
        %982 = vst [vmem:[#allocation2 + $0x40] sm:$0xff] %v950
        %983 = vst [vmem:[#allocation2 + $0x48] sm:$0xff] %v951
        %984 = vst [vmem:[#allocation2 + $0x50] sm:$0xff] %v952
        %985 = vst [vmem:[#allocation2 + $0x58] sm:$0xff] %v953
        %986 = vst [vmem:[#allocation2 + $0x60] sm:$0xff] %v954
        %987 = vst [vmem:[#allocation2 + $0x68] sm:$0xff] %v955
        %988 = vst [vmem:[#allocation2 + $0x70] sm:$0xff] %v956
        %989 = vst [vmem:[#allocation2 + $0x78] sm:$0xff] %v957
        %990 = vst [vmem:[#allocation2 + $0x80] sm:$0xff] %v958
        %991 = vst [vmem:[#allocation2 + $0x88] sm:$0xff] %v959
        %992 = vst [vmem:[#allocation2 + $0x90] sm:$0xff] %v960
        %993 = vst [vmem:[#allocation2 + $0x98] sm:$0xff] %v961
        %994 = vst [vmem:[#allocation2 + $0xa0] sm:$0xff] %v962
        %995 = vst [vmem:[#allocation2 + $0xa8] sm:$0xff] %v963
        %996 = vst [vmem:[#allocation2 + $0xb0] sm:$0xff] %v964
        %997 = vst [vmem:[#allocation2 + $0xb8] sm:$0xff] %v965
        %998 = vst [vmem:[#allocation2 + $0xc0] sm:$0xff] %v966
        %999 = vst [vmem:[#allocation2 + $0xc8] sm:$0xff] %v967
        %1000 = vst [vmem:[#allocation2 + $0xd0] sm:$0xff] %v968
        %1001 = vst [vmem:[#allocation2 + $0xd8] sm:$0xff] %v969
        %1002 = vst [vmem:[#allocation2 + $0xe0] sm:$0xff] %v970
        %1003 = vst [vmem:[#allocation2 + $0xe8] sm:$0xff] %v971
        %1004 = vst [vmem:[#allocation2 + $0xf0] sm:$0xff] %v972
        %1005 = vst [vmem:[#allocation2 + $0xf8] sm:$0xff] %v973
        // Predicated region
        $region57: #{tpu_custom_call.1} parent=43 // pred_check
          %p1006 = pneg %p393
        $region58: #{tpu_custom_call.1} parent=43 // pred_check_branch
          %1008 = sbr.rel (%p1006) target = $region60
        $region59: #{tpu_custom_call.1} parent=43 // pred_region
          %v1009 = vld [vmem:[#allocation2] sm:$0xff]
          %v1010 = vld [vmem:[#allocation2 + $0x8] sm:$0xff]
          %v1011 = vld [vmem:[#allocation2 + $0x10] sm:$0xff]
          %v1012 = vld [vmem:[#allocation2 + $0x18] sm:$0xff]
          %v1013 = vld [vmem:[#allocation2 + $0x20] sm:$0xff]
          %v1014 = vld [vmem:[#allocation2 + $0x28] sm:$0xff]
          %v1015 = vld [vmem:[#allocation2 + $0x30] sm:$0xff]
          %v1016 = vld [vmem:[#allocation2 + $0x38] sm:$0xff]
          %v1017 = vld [vmem:[#allocation2 + $0x40] sm:$0xff]
          %v1018 = vld [vmem:[#allocation2 + $0x48] sm:$0xff]
          %v1019 = vld [vmem:[#allocation2 + $0x50] sm:$0xff]
          %v1020 = vld [vmem:[#allocation2 + $0x58] sm:$0xff]
          %v1021 = vld [vmem:[#allocation2 + $0x60] sm:$0xff]
          %v1022 = vld [vmem:[#allocation2 + $0x68] sm:$0xff]
          %v1023 = vld [vmem:[#allocation2 + $0x70] sm:$0xff]
          %v1024 = vld [vmem:[#allocation2 + $0x78] sm:$0xff]
          %v1025 = vld [vmem:[#allocation2 + $0x80] sm:$0xff]
          %v1026 = vld [vmem:[#allocation2 + $0x88] sm:$0xff]
          %v1027 = vld [vmem:[#allocation2 + $0x90] sm:$0xff]
          %v1028 = vld [vmem:[#allocation2 + $0x98] sm:$0xff]
          %v1029 = vld [vmem:[#allocation2 + $0xa0] sm:$0xff]
          %v1030 = vld [vmem:[#allocation2 + $0xa8] sm:$0xff]
          %v1031 = vld [vmem:[#allocation2 + $0xb0] sm:$0xff]
          %v1032 = vld [vmem:[#allocation2 + $0xb8] sm:$0xff]
          %v1033 = vld [vmem:[#allocation2 + $0xc0] sm:$0xff]
          %v1034 = vld [vmem:[#allocation2 + $0xc8] sm:$0xff]
          %v1035 = vld [vmem:[#allocation2 + $0xd0] sm:$0xff]
          %v1036 = vld [vmem:[#allocation2 + $0xd8] sm:$0xff]
          %v1037 = vld [vmem:[#allocation2 + $0xe0] sm:$0xff]
          %v1038 = vld [vmem:[#allocation2 + $0xe8] sm:$0xff]
          %v1039 = vld [vmem:[#allocation2 + $0xf0] sm:$0xff]
          %v1040 = vld [vmem:[#allocation2 + $0xf8] sm:$0xff]
          %v1041 = vld [vmem:[%s387] sm:$0x1]
          %v1043 = vlaneseq
          %v1044 = vshrl.u32 %v1043, 7
          %v1045 = vsub.s32 0, %v1044
          %v1046 = vrot.slane %v1041, %v1045
          %v1048 = vmul.f32 %v1009, %v1046
          %v1049 = vmul.f32 %v1010, %v1046
          %v1050 = vmul.f32 %v1011, %v1046
          %v1051 = vmul.f32 %v1012, %v1046
          %v1052 = vmul.f32 %v1013, %v1046
          %v1053 = vmul.f32 %v1014, %v1046
          %v1054 = vmul.f32 %v1015, %v1046
          %v1055 = vmul.f32 %v1016, %v1046
          %v1056 = vmul.f32 %v1017, %v1046
          %v1057 = vmul.f32 %v1018, %v1046
          %v1058 = vmul.f32 %v1019, %v1046
          %v1059 = vmul.f32 %v1020, %v1046
          %v1060 = vmul.f32 %v1021, %v1046
          %v1061 = vmul.f32 %v1022, %v1046
          %v1062 = vmul.f32 %v1023, %v1046
          %v1063 = vmul.f32 %v1024, %v1046
          %v1064 = vmul.f32 %v1025, %v1046
          %v1065 = vmul.f32 %v1026, %v1046
          %v1066 = vmul.f32 %v1027, %v1046
          %v1067 = vmul.f32 %v1028, %v1046
          %v1068 = vmul.f32 %v1029, %v1046
          %v1069 = vmul.f32 %v1030, %v1046
          %v1070 = vmul.f32 %v1031, %v1046
          %v1071 = vmul.f32 %v1032, %v1046
          %v1072 = vmul.f32 %v1033, %v1046
          %v1073 = vmul.f32 %v1034, %v1046
          %v1074 = vmul.f32 %v1035, %v1046
          %v1075 = vmul.f32 %v1036, %v1046
          %v1076 = vmul.f32 %v1037, %v1046
          %v1077 = vmul.f32 %v1038, %v1046
          %v1078 = vmul.f32 %v1039, %v1046
          %v1079 = vmul.f32 %v1040, %v1046
          %v1080 = vld [vmem:[%s390] sm:$0x1]
          %v1082 = vlaneseq
          %v1083 = vshrl.u32 %v1082, 7
          %v1084 = vsub.s32 0, %v1083
          %v1085 = vrot.slane %v1080, %v1084
          %v1087 = vadd.f32 %v1048, %v1085
          %v1088 = vadd.f32 %v1049, %v1085
          %v1089 = vadd.f32 %v1050, %v1085
          %v1090 = vadd.f32 %v1051, %v1085
          %v1091 = vadd.f32 %v1052, %v1085
          %v1092 = vadd.f32 %v1053, %v1085
          %v1093 = vadd.f32 %v1054, %v1085
          %v1094 = vadd.f32 %v1055, %v1085
          %v1095 = vadd.f32 %v1056, %v1085
          %v1096 = vadd.f32 %v1057, %v1085
          %v1097 = vadd.f32 %v1058, %v1085
          %v1098 = vadd.f32 %v1059, %v1085
          %v1099 = vadd.f32 %v1060, %v1085
          %v1100 = vadd.f32 %v1061, %v1085
          %v1101 = vadd.f32 %v1062, %v1085
          %v1102 = vadd.f32 %v1063, %v1085
          %v1103 = vadd.f32 %v1064, %v1085
          %v1104 = vadd.f32 %v1065, %v1085
          %v1105 = vadd.f32 %v1066, %v1085
          %v1106 = vadd.f32 %v1067, %v1085
          %v1107 = vadd.f32 %v1068, %v1085
          %v1108 = vadd.f32 %v1069, %v1085
          %v1109 = vadd.f32 %v1070, %v1085
          %v1110 = vadd.f32 %v1071, %v1085
          %v1111 = vadd.f32 %v1072, %v1085
          %v1112 = vadd.f32 %v1073, %v1085
          %v1113 = vadd.f32 %v1074, %v1085
          %v1114 = vadd.f32 %v1075, %v1085
          %v1115 = vadd.f32 %v1076, %v1085
          %v1116 = vadd.f32 %v1077, %v1085
          %v1117 = vadd.f32 %v1078, %v1085
          %v1118 = vadd.f32 %v1079, %v1085
          %v1119 = vmax.f32 %v1087, 0.0
          %v1120 = vmax.f32 %v1088, 0.0
          %v1121 = vmax.f32 %v1089, 0.0
          %v1122 = vmax.f32 %v1090, 0.0
          %v1123 = vmax.f32 %v1091, 0.0
          %v1124 = vmax.f32 %v1092, 0.0
          %v1125 = vmax.f32 %v1093, 0.0
          %v1126 = vmax.f32 %v1094, 0.0
          %v1127 = vmax.f32 %v1095, 0.0
          %v1128 = vmax.f32 %v1096, 0.0
          %v1129 = vmax.f32 %v1097, 0.0
          %v1130 = vmax.f32 %v1098, 0.0
          %v1131 = vmax.f32 %v1099, 0.0
          %v1132 = vmax.f32 %v1100, 0.0
          %v1133 = vmax.f32 %v1101, 0.0
          %v1134 = vmax.f32 %v1102, 0.0
          %v1135 = vmax.f32 %v1103, 0.0
          %v1136 = vmax.f32 %v1104, 0.0
          %v1137 = vmax.f32 %v1105, 0.0
          %v1138 = vmax.f32 %v1106, 0.0
          %v1139 = vmax.f32 %v1107, 0.0
          %v1140 = vmax.f32 %v1108, 0.0
          %v1141 = vmax.f32 %v1109, 0.0
          %v1142 = vmax.f32 %v1110, 0.0
          %v1143 = vmax.f32 %v1111, 0.0
          %v1144 = vmax.f32 %v1112, 0.0
          %v1145 = vmax.f32 %v1113, 0.0
          %v1146 = vmax.f32 %v1114, 0.0
          %v1147 = vmax.f32 %v1115, 0.0
          %v1148 = vmax.f32 %v1116, 0.0
          %v1149 = vmax.f32 %v1117, 0.0
          %v1150 = vmax.f32 %v1118, 0.0
          %v1151 = vpack.c.bf16 %v1120, %v1119
          %v1152 = vpack.c.bf16 %v1122, %v1121
          %v1153 = vpack.c.bf16 %v1124, %v1123
          %v1154 = vpack.c.bf16 %v1126, %v1125
          %v1155 = vpack.c.bf16 %v1128, %v1127
          %v1156 = vpack.c.bf16 %v1130, %v1129
          %v1157 = vpack.c.bf16 %v1132, %v1131
          %v1158 = vpack.c.bf16 %v1134, %v1133
          %v1159 = vpack.c.bf16 %v1136, %v1135
          %v1160 = vpack.c.bf16 %v1138, %v1137
          %v1161 = vpack.c.bf16 %v1140, %v1139
          %v1162 = vpack.c.bf16 %v1142, %v1141
          %v1163 = vpack.c.bf16 %v1144, %v1143
          %v1164 = vpack.c.bf16 %v1146, %v1145
          %v1165 = vpack.c.bf16 %v1148, %v1147
          %v1166 = vpack.c.bf16 %v1150, %v1149
          %v1183 = vunpack.c.l.b16 %v1151
          %v1184 = vunpack.c.h.b16 %v1151
          %v1185 = vunpack.c.l.b16 %v1152
          %v1186 = vunpack.c.h.b16 %v1152
          %v1187 = vunpack.c.l.b16 %v1153
          %v1188 = vunpack.c.h.b16 %v1153
          %v1189 = vunpack.c.l.b16 %v1154
          %v1190 = vunpack.c.h.b16 %v1154
          %v1191 = vunpack.c.l.b16 %v1155
          %v1192 = vunpack.c.h.b16 %v1155
          %v1193 = vunpack.c.l.b16 %v1156
          %v1194 = vunpack.c.h.b16 %v1156
          %v1195 = vunpack.c.l.b16 %v1157
          %v1196 = vunpack.c.h.b16 %v1157
          %v1197 = vunpack.c.l.b16 %v1158
          %v1198 = vunpack.c.h.b16 %v1158
          %v1199 = vunpack.c.l.b16 %v1159
          %v1200 = vunpack.c.h.b16 %v1159
          %v1201 = vunpack.c.l.b16 %v1160
          %v1202 = vunpack.c.h.b16 %v1160
          %v1203 = vunpack.c.l.b16 %v1161
          %v1204 = vunpack.c.h.b16 %v1161
          %v1205 = vunpack.c.l.b16 %v1162
          %v1206 = vunpack.c.h.b16 %v1162
          %v1207 = vunpack.c.l.b16 %v1163
          %v1208 = vunpack.c.h.b16 %v1163
          %v1209 = vunpack.c.l.b16 %v1164
          %v1210 = vunpack.c.h.b16 %v1164
          %v1211 = vunpack.c.l.b16 %v1165
          %v1212 = vunpack.c.h.b16 %v1165
          %v1213 = vunpack.c.l.b16 %v1166
          %v1214 = vunpack.c.h.b16 %v1166
          %v1215 = vpack.c.b16 %v1183, %v1183
          %v1216 = vpack.c.b16 %v1184, %v1184
          %v1217 = vpack.c.b16 %v1185, %v1185
          %v1218 = vpack.c.b16 %v1186, %v1186
          %v1219 = vpack.c.b16 %v1187, %v1187
          %v1220 = vpack.c.b16 %v1188, %v1188
          %v1221 = vpack.c.b16 %v1189, %v1189
          %v1222 = vpack.c.b16 %v1190, %v1190
          %v1223 = vpack.c.b16 %v1191, %v1191
          %v1224 = vpack.c.b16 %v1192, %v1192
          %v1225 = vpack.c.b16 %v1193, %v1193
          %v1226 = vpack.c.b16 %v1194, %v1194
          %v1227 = vpack.c.b16 %v1195, %v1195
          %v1228 = vpack.c.b16 %v1196, %v1196
          %v1229 = vpack.c.b16 %v1197, %v1197
          %v1230 = vpack.c.b16 %v1198, %v1198
          %v1231 = vpack.c.b16 %v1199, %v1199
          %v1232 = vpack.c.b16 %v1200, %v1200
          %v1233 = vpack.c.b16 %v1201, %v1201
          %v1234 = vpack.c.b16 %v1202, %v1202
          %v1235 = vpack.c.b16 %v1203, %v1203
          %v1236 = vpack.c.b16 %v1204, %v1204
          %v1237 = vpack.c.b16 %v1205, %v1205
          %v1238 = vpack.c.b16 %v1206, %v1206
          %v1239 = vpack.c.b16 %v1207, %v1207
          %v1240 = vpack.c.b16 %v1208, %v1208
          %v1241 = vpack.c.b16 %v1209, %v1209
          %v1242 = vpack.c.b16 %v1210, %v1210
          %v1243 = vpack.c.b16 %v1211, %v1211
          %v1244 = vpack.c.b16 %v1212, %v1212
          %v1245 = vpack.c.b16 %v1213, %v1213
          %v1246 = vpack.c.b16 %v1214, %v1214
          %1279 = vst [vmem:[%s371] sm:$0xf] %v1215
          %1280 = vst [vmem:[%s371 + $0x4] sm:$0xf] %v1216
          %1281 = vst [vmem:[%s371 + $0x8] sm:$0xf] %v1217
          %1282 = vst [vmem:[%s371 + $0xc] sm:$0xf] %v1218
          %1283 = vst [vmem:[%s371 + $0x10] sm:$0xf] %v1219
          %1284 = vst [vmem:[%s371 + $0x14] sm:$0xf] %v1220
          %1285 = vst [vmem:[%s371 + $0x18] sm:$0xf] %v1221
          %1286 = vst [vmem:[%s371 + $0x1c] sm:$0xf] %v1222
          %1287 = vst [vmem:[%s371 + $0x20] sm:$0xf] %v1223
          %1288 = vst [vmem:[%s371 + $0x24] sm:$0xf] %v1224
          %1289 = vst [vmem:[%s371 + $0x28] sm:$0xf] %v1225
          %1290 = vst [vmem:[%s371 + $0x2c] sm:$0xf] %v1226
          %1291 = vst [vmem:[%s371 + $0x30] sm:$0xf] %v1227
          %1292 = vst [vmem:[%s371 + $0x34] sm:$0xf] %v1228
          %1293 = vst [vmem:[%s371 + $0x38] sm:$0xf] %v1229
          %1294 = vst [vmem:[%s371 + $0x3c] sm:$0xf] %v1230
          %1295 = vst [vmem:[%s371 + $0x40] sm:$0xf] %v1231
          %1296 = vst [vmem:[%s371 + $0x44] sm:$0xf] %v1232
          %1297 = vst [vmem:[%s371 + $0x48] sm:$0xf] %v1233
          %1298 = vst [vmem:[%s371 + $0x4c] sm:$0xf] %v1234
          %1299 = vst [vmem:[%s371 + $0x50] sm:$0xf] %v1235
          %1300 = vst [vmem:[%s371 + $0x54] sm:$0xf] %v1236
          %1301 = vst [vmem:[%s371 + $0x58] sm:$0xf] %v1237
          %1302 = vst [vmem:[%s371 + $0x5c] sm:$0xf] %v1238
          %1303 = vst [vmem:[%s371 + $0x60] sm:$0xf] %v1239
          %1304 = vst [vmem:[%s371 + $0x64] sm:$0xf] %v1240
          %1305 = vst [vmem:[%s371 + $0x68] sm:$0xf] %v1241
          %1306 = vst [vmem:[%s371 + $0x6c] sm:$0xf] %v1242
          %1307 = vst [vmem:[%s371 + $0x70] sm:$0xf] %v1243
          %1308 = vst [vmem:[%s371 + $0x74] sm:$0xf] %v1244
          %1309 = vst [vmem:[%s371 + $0x78] sm:$0xf] %v1245
          %1310 = vst [vmem:[%s371 + $0x7c] sm:$0xf] %v1246
        $region60: #{tpu_custom_call.1} parent=43 // pred_fallthru
          _
        %s1311 = sand.u32 %s213, 1
        %s1312 = scalar_lea.sflag [#allocation5], %s1311
        %s1313 = sand.u32 %s213, 1
        %s1314 = smul.addr %s1313, 128
        %s1315 = scalar_lea.vmem [#allocation8], %s1314
        // Predicated region
        $region61: #{tpu_custom_call.1} parent=43 // pred_check
          %p1316 = pneg %p223
        $region62: #{tpu_custom_call.1} parent=43 // pred_check_branch
          %1318 = sbr.rel (%p1316) target = $region64
        $region63: #{tpu_custom_call.1} parent=43 // pred_region
          %s1319 = smul.u32 32, %s29
          %s1321 = ssub.s32 2048, 2048
          %1322 = vsyncadd %s1312, %s1321
          %s1323 = sadd.s32 %s30, %s1319
          %s1324 = smul.addr %s1323, 64
          %s1325 = scalar_lea.hbm %s6, %s1324
          %s1326 = sshll.u32 %s1315, 4
          %s1327 = int_to_ptr.vmem [resolvable:$true] %s1326
          %1332 = dma.vmem_to_hbm [thread:$0]  %s1327, 2048, %s1325, %s1312, 64, 64, 4
        $region64: #{tpu_custom_call.1} parent=43 // pred_fallthru
          _
      $region44: #{tpu_custom_call.1} parent=5 // pred_fallthru
        _
      %p1333 = scmp.le.s32.totalorder 2, %s19
      // Predicated region
      $region65: #{tpu_custom_call.1} parent=5 // pred_check
        %p1334 = pneg %p1333
      $region66: #{tpu_custom_call.1} parent=5 // pred_check_branch
        %1336 = sbr.rel (%p1334) target = $region68
      $region67: #{tpu_custom_call.1} parent=5 // pred_region
        %s1337 = ssub.s32 %s19, 2
        // Predicated region
        $region69: #{tpu_custom_call.1} parent=67 // pred_check
          %p1338 = pneg %p229
        $region70: #{tpu_custom_call.1} parent=67 // pred_check_branch
          %1340 = sbr.rel (%p1338) target = $region72
        $region71: #{tpu_custom_call.1} parent=67 // pred_region
          %s1341 = sand.u32 %s214, 1
          %s1342 = scalar_lea.sflag [#allocation5], %s1341
          %s1343 = sand.u32 %s214, 1
          %s1344 = smul.addr %s1343, 128
          %s1345 = scalar_lea.vmem [#allocation8], %s1344
          %1346 = dma.done %s1342, 2048
        $region72: #{tpu_custom_call.1} parent=67 // pred_fallthru
          _
      $region68: #{tpu_custom_call.1} parent=5 // pred_fallthru
        _
    $region6: #{tpu_custom_call.1} parent=1 // loop_footer
      %s23 = sadd.s32 1, %s19
    $region7: #{tpu_custom_call.1} parent=1 // loop_footer_branch
      %18 = sbr.rel target = $region3
    $region8: #{tpu_custom_call.1} parent=1 // loop_exit
      _
    %1347 = vsyncpa [#allocation4], 1
    %s1348 = scalar_lea.sflag [#allocation4], 1
    %1349 = vsyncpa %s1348, 1
    %1350 = vsyncpa [#allocation7], 1
    %1351 = vsyncpa [#allocation5], 1
    %s1352 = scalar_lea.sflag [#allocation5], 1
    %1353 = vsyncpa %s1352, 1

</llo_original>
